<compile_context>
chip_gen: v7x
topology: tpu7x:2x2x1
jax: 0.10.0
libtpu: 0.0.40
codegen_flags: <defaults>
</compile_context>

<pallas_src>
import jax
import jax.numpy as jnp
from jax.experimental import pallas as pl
from jax.experimental.pallas import tpu as pltpu

N_ACTIONS = 3
N_STATES = 626
H1 = 1024
H2 = 256

K1_PAD = 640      # 626 padded up to a multiple of 128
OUT_PAD = 128     # lane-dense output width (true Q-values live in cols 0..2)


def _round_up(x, m):
    return ((x + m - 1) // m) * m


def net_kernel(x_ref, w1_ref, b1_ref, w2_ref, b2_ref, w3_ref, b3_ref, o_ref):
    # fc1 + ReLU: bf16 operands, f32 accumulate on the MXU.
    h1 = jnp.dot(x_ref[...], w1_ref[...],
                 preferred_element_type=jnp.float32) + b1_ref[...]
    h1 = jnp.maximum(h1, 0.0).astype(jnp.bfloat16)
    # fc2 + ReLU
    h2 = jnp.dot(h1, w2_ref[...],
                 preferred_element_type=jnp.float32) + b2_ref[...]
    h2 = jnp.maximum(h2, 0.0).astype(jnp.bfloat16)
    # out (no activation); padded output columns have zero weight/bias -> zero.
    o_ref[...] = jnp.dot(h2, w3_ref[...],
                         preferred_element_type=jnp.float32) + b3_ref[...]


@jax.jit
def net_forward(x, w1p, b1p, w2p, b2p, w3p, b3p):
    """x: (B, N_STATES) f32. Padded/bf16 params from prepare_kernel_params."""
    B = x.shape[0]
    # Batch tile: multiple of 16 (bf16 sublane packing), capped at 256.
    TB = min(256, _round_up(max(B, 1), 16))
    Bp = _round_up(B, TB)
    nb = Bp // TB

    # Zero-pad batch rows / feature columns and cast to bf16 in one shot
    # (zeros keep the fc1 result exact; cast matches the in-kernel bf16 math).
    xp = jnp.zeros((Bp, K1_PAD), jnp.bfloat16).at[:B, :N_STATES].set(
        x.astype(jnp.bfloat16))

    const = lambda shape: pl.BlockSpec(shape, lambda i: (0, 0))

    out_padded = pl.pallas_call(
        net_kernel,
        out_shape=jax.ShapeDtypeStruct((Bp, OUT_PAD), jnp.float32),
        grid=(nb,),
        in_specs=[
            pl.BlockSpec((TB, K1_PAD), lambda i: (i, 0)),   # x tile over batch
            const((K1_PAD, H1)), const((1, H1)),            # fc1 (resident)
            const((H1, H2)), const((1, H2)),                # fc2 (resident)
            const((H2, OUT_PAD)), const((1, OUT_PAD)),      # out (resident)
        ],
        out_specs=pl.BlockSpec((TB, OUT_PAD), lambda i: (i, 0)),
        compiler_params=pltpu.CompilerParams(
            dimension_semantics=("parallel",),              # v7x: 2 TCs
        ),
    )(xp, w1p, b1p, w2p, b2p, w3p, b3p)

    return out_padded[:B, :N_ACTIONS]


def init_params(key):
    """f32 params mimicking PyTorch Linear default init U(-1/sqrt(fan_in), ..).
    Weights stored as (in_features, out_features) so forward is x @ W + b."""
    def linear(key, fan_in, fan_out):
        kw, kb = jax.random.split(key)
        bound = 1.0 / jnp.sqrt(fan_in)
        w = jax.random.uniform(kw, (fan_in, fan_out), jnp.float32, -bound, bound)
        b = jax.random.uniform(kb, (1, fan_out), jnp.float32, -bound, bound)
        return w, b

    k1, k2, k3 = jax.random.split(key, 3)
    w1, b1 = linear(k1, N_STATES, H1)
    w2, b2 = linear(k2, H1, H2)
    w3, b3 = linear(k3, H2, N_ACTIONS)
    return w1, b1, w2, b2, w3, b3


def prepare_kernel_params(w1, b1, w2, b2, w3, b3):
    """Pad to tile-aligned shapes and cast weights to bf16 (biases stay f32)."""
    w1p = jnp.zeros((K1_PAD, H1), jnp.bfloat16).at[:N_STATES, :].set(
        w1.astype(jnp.bfloat16))
    w2p = w2.astype(jnp.bfloat16)
    w3p = jnp.zeros((H2, OUT_PAD), jnp.bfloat16).at[:, :N_ACTIONS].set(
        w3.astype(jnp.bfloat16))
    b1p = b1.astype(jnp.float32)
    b2p = b2.astype(jnp.float32)
    b3p = jnp.zeros((1, OUT_PAD), jnp.float32).at[:, :N_ACTIONS].set(b3)
    return w1p, b1p, w2p, b2p, w3p, b3p


def reference_forward_f32(x, w1, b1, w2, b2, w3, b3):
    h1 = jnp.maximum(x @ w1 + b1, 0.0)
    h2 = jnp.maximum(h1 @ w2 + b2, 0.0)
    return h2 @ w3 + b3


def reference_forward_bf16(x, w1, b1, w2, b2, w3, b3):
    """Same bf16-operand / f32-accumulate math as the kernel (tight check)."""
    bd = lambda a, w: jnp.dot(a.astype(jnp.bfloat16), w.astype(jnp.bfloat16),
                              preferred_element_type=jnp.float32)
    h1 = jnp.maximum(bd(x, w1) + b1, 0.0)
    h2 = jnp.maximum(bd(h1, w2) + b2, 0.0)
    return bd(h2, w3) + b3


if __name__ == "__main__":
    key = jax.random.PRNGKey(0)
    kx, kp = jax.random.split(key)

    B = 8  # small batch (the wrapper scales to large B with a parallel grid)
    x = jax.random.normal(kx, (B, N_STATES), jnp.float32)
    params_f32 = init_params(kp)
    params_kernel = prepare_kernel_params(*params_f32)

    out = net_forward(x, *params_kernel)
    out = jax.block_until_ready(out)
    assert out.shape == (B, N_ACTIONS)

    # Tight check vs. a reference that does the same bf16-operand math.
    ref_bf16 = reference_forward_bf16(x, *params_f32)
    assert jnp.allclose(out, ref_bf16, atol=2e-3, rtol=2e-3), \
        "mismatch vs bf16-matched reference"

    # Loose check vs. the original f32 PyTorch-equivalent forward.
    ref_f32 = reference_forward_f32(x, *params_f32)
    assert jnp.allclose(out, ref_f32, atol=1e-1, rtol=1e-1), \
        "mismatch vs f32 reference"

    print("KERNEL_OK")
</pallas_src>

<mosaic_0001>
module attributes {stable_mosaic.version = 11 : i64} {
  func.func @net_kernel(%arg0: i32, %arg1: memref<16x640xbf16, #tpu.memory_space<vmem>>, %arg2: memref<640x1024xbf16, #tpu.memory_space<vmem>>, %arg3: memref<1x1024xf32, #tpu.memory_space<vmem>>, %arg4: memref<1024x256xbf16, #tpu.memory_space<vmem>>, %arg5: memref<1x256xf32, #tpu.memory_space<vmem>>, %arg6: memref<256x128xbf16, #tpu.memory_space<vmem>>, %arg7: memref<1x128xf32, #tpu.memory_space<vmem>>, %arg8: memref<16x128xf32, #tpu.memory_space<vmem>>) attributes {dimension_semantics = [#tpu.dimension_semantics<parallel>], iteration_bounds = array<i64: 1>, scalar_prefetch = 0 : i64, scratch_operands = 0 : i64, tpu.core_type = #tpu.core_type<tc>, window_params = [{transform_indices = @transform_0, window_bounds = array<i64: 16, 640>}, {pipeline_mode = #tpu.pipeline_mode<synchronous>, transform_indices = @transform_1, window_bounds = array<i64: 640, 1024>}, {pipeline_mode = #tpu.pipeline_mode<synchronous>, transform_indices = @transform_2, window_bounds = array<i64: 1, 1024>}, {pipeline_mode = #tpu.pipeline_mode<synchronous>, transform_indices = @transform_3, window_bounds = array<i64: 1024, 256>}, {pipeline_mode = #tpu.pipeline_mode<synchronous>, transform_indices = @transform_4, window_bounds = array<i64: 1, 256>}, {pipeline_mode = #tpu.pipeline_mode<synchronous>, transform_indices = @transform_5, window_bounds = array<i64: 256, 128>}, {pipeline_mode = #tpu.pipeline_mode<synchronous>, transform_indices = @transform_6, window_bounds = array<i64: 1, 128>}, {transform_indices = @transform_7, window_bounds = array<i64: 16, 128>}]} {
    %c0 = arith.constant 0 : index
    %c0_0 = arith.constant 0 : index
    %0 = vector.load %arg1[%c0, %c0_0] : memref<16x640xbf16, #tpu.memory_space<vmem>>, vector<16x640xbf16>
    %c0_1 = arith.constant 0 : index
    %c0_2 = arith.constant 0 : index
    %1 = vector.load %arg2[%c0_1, %c0_2] : memref<640x1024xbf16, #tpu.memory_space<vmem>>, vector<640x1024xbf16>
    %cst = arith.constant dense<0.000000e+00> : vector<16x1024xf32>
    %2 = tpu.matmul %0, %1, %cst {dimension_numbers = #tpu.dot_dimension_numbers<[1], [0], [0], [1], [0, 0, 1, 1], [], []>} : vector<16x640xbf16>, vector<640x1024xbf16>, vector<16x1024xf32> -> vector<16x1024xf32>
    %c0_3 = arith.constant 0 : index
    %c0_4 = arith.constant 0 : index
    %3 = vector.load %arg3[%c0_3, %c0_4] : memref<1x1024xf32, #tpu.memory_space<vmem>>, vector<1x1024xf32>
    %4 = vector.broadcast %3 : vector<1x1024xf32> to vector<16x1024xf32>
    %5 = arith.addf %2, %4 : vector<16x1024xf32>
    %cst_5 = arith.constant 0.000000e+00 : f32
    %6 = vector.broadcast %cst_5 : f32 to vector<16x1024xf32>
    %7 = arith.maximumf %5, %6 : vector<16x1024xf32>
    %8 = arith.truncf %7 : vector<16x1024xf32> to vector<16x1024xbf16>
    %c0_6 = arith.constant 0 : index
    %c0_7 = arith.constant 0 : index
    %9 = vector.load %arg4[%c0_6, %c0_7] : memref<1024x256xbf16, #tpu.memory_space<vmem>>, vector<1024x256xbf16>
    %cst_8 = arith.constant dense<0.000000e+00> : vector<16x256xf32>
    %10 = tpu.matmul %8, %9, %cst_8 {dimension_numbers = #tpu.dot_dimension_numbers<[1], [0], [0], [1], [0, 0, 1, 1], [], []>} : vector<16x1024xbf16>, vector<1024x256xbf16>, vector<16x256xf32> -> vector<16x256xf32>
    %c0_9 = arith.constant 0 : index
    %c0_10 = arith.constant 0 : index
    %11 = vector.load %arg5[%c0_9, %c0_10] : memref<1x256xf32, #tpu.memory_space<vmem>>, vector<1x256xf32>
    %12 = vector.broadcast %11 : vector<1x256xf32> to vector<16x256xf32>
    %13 = arith.addf %10, %12 : vector<16x256xf32>
    %cst_11 = arith.constant 0.000000e+00 : f32
    %14 = vector.broadcast %cst_11 : f32 to vector<16x256xf32>
    %15 = arith.maximumf %13, %14 : vector<16x256xf32>
    %16 = arith.truncf %15 : vector<16x256xf32> to vector<16x256xbf16>
    %c0_12 = arith.constant 0 : index
    %c0_13 = arith.constant 0 : index
    %17 = vector.load %arg6[%c0_12, %c0_13] : memref<256x128xbf16, #tpu.memory_space<vmem>>, vector<256x128xbf16>
    %cst_14 = arith.constant dense<0.000000e+00> : vector<16x128xf32>
    %18 = tpu.matmul %16, %17, %cst_14 {dimension_numbers = #tpu.dot_dimension_numbers<[1], [0], [0], [1], [0, 0, 1, 1], [], []>} : vector<16x256xbf16>, vector<256x128xbf16>, vector<16x128xf32> -> vector<16x128xf32>
    %c0_15 = arith.constant 0 : index
    %c0_16 = arith.constant 0 : index
    %19 = vector.load %arg7[%c0_15, %c0_16] : memref<1x128xf32, #tpu.memory_space<vmem>>, vector<1x128xf32>
    %20 = vector.broadcast %19 : vector<1x128xf32> to vector<16x128xf32>
    %21 = arith.addf %18, %20 : vector<16x128xf32>
    %c0_17 = arith.constant 0 : index
    %c0_18 = arith.constant 0 : index
    %22 = vector.load %arg8[%c0_17, %c0_18] : memref<16x128xf32, #tpu.memory_space<vmem>>, vector<16x128xf32>
    tpu.vector_store %arg8[%c0_17, %c0_18], %21 {strides = array<i32>} : memref<16x128xf32, #tpu.memory_space<vmem>>, vector<16x128xf32>,
    return
  }
  func.func @transform_0(%arg0: i32) -> (i32, i32) {
    %c0_i32 = arith.constant 0 : i32
    %c0_i32_0 = arith.constant 0 : i32
    return %arg0, %c0_i32 : i32, i32
  }
  func.func @transform_1(%arg0: i32) -> (i32, i32) {
    %c0_i32 = arith.constant 0 : i32
    %c0_i32_0 = arith.constant 0 : i32
    %c0_i32_1 = arith.constant 0 : i32
    return %c0_i32, %c0_i32_0 : i32, i32
  }
  func.func @transform_2(%arg0: i32) -> (i32, i32) {
    %c0_i32 = arith.constant 0 : i32
    %c0_i32_0 = arith.constant 0 : i32
    %c0_i32_1 = arith.constant 0 : i32
    return %c0_i32, %c0_i32_0 : i32, i32
  }
  func.func @transform_3(%arg0: i32) -> (i32, i32) {
    %c0_i32 = arith.constant 0 : i32
    %c0_i32_0 = arith.constant 0 : i32
    %c0_i32_1 = arith.constant 0 : i32
    return %c0_i32, %c0_i32_0 : i32, i32
  }
  func.func @transform_4(%arg0: i32) -> (i32, i32) {
    %c0_i32 = arith.constant 0 : i32
    %c0_i32_0 = arith.constant 0 : i32
    %c0_i32_1 = arith.constant 0 : i32
    return %c0_i32, %c0_i32_0 : i32, i32
  }
  func.func @transform_5(%arg0: i32) -> (i32, i32) {
    %c0_i32 = arith.constant 0 : i32
    %c0_i32_0 = arith.constant 0 : i32
    %c0_i32_1 = arith.constant 0 : i32
    return %c0_i32, %c0_i32_0 : i32, i32
  }
  func.func @transform_6(%arg0: i32) -> (i32, i32) {
    %c0_i32 = arith.constant 0 : i32
    %c0_i32_0 = arith.constant 0 : i32
    %c0_i32_1 = arith.constant 0 : i32
    return %c0_i32, %c0_i32_0 : i32, i32
  }
  func.func @transform_7(%arg0: i32) -> (i32, i32) {
    %c0_i32 = arith.constant 0 : i32
    %c0_i32_0 = arith.constant 0 : i32
    return %arg0, %c0_i32 : i32, i32
  }
}

</mosaic_0001>

<llo_original>
// kernel: net_forward.1
$region0: #{net_forward.1}
  #allocation0 [shape = 'u32[]', space=smem, size = 0x4, offset = 0x4, fixed_abs, tag = 'smem constant byte address 0x4 - core index']
  #allocation1 [shape = 'u32[144,128]{1,0:T(1,128)}', space=vmem, size = 0x12000, scoped, tag = 'internal scratch']
  %s0 = inlined_call_operand.vmem [shape: bf16[16,640], index: 0, kind: input, shape index: {}]
  %s1 = inlined_call_operand.hbm [shape: bf16[640,1024], index: 1, kind: input, shape index: {}]
  %s2 = inlined_call_operand.hbm [shape: f32[1,1024], index: 2, kind: input, shape index: {}]
  %s3 = inlined_call_operand.hbm [shape: bf16[1024,256], index: 3, kind: input, shape index: {}]
  %s4 = inlined_call_operand.hbm [shape: f32[1,256], index: 4, kind: input, shape index: {}]
  %s5 = inlined_call_operand.hbm [shape: bf16[256,128], index: 5, kind: input, shape index: {}]
  %s6 = inlined_call_operand.hbm [shape: f32[1,128], index: 6, kind: input, shape index: {}]
  %s7 = inlined_call_operand.vmem [shape: f32[16,128], index: 7, kind: output, shape index: {}]
  %s8 = sld [smem:[#allocation0]]
  $region62: #{net_forward.1} parent=0
    _
  %s10 = ssub.s32 1, %s8
  %s11 = scalar_select 0, %s10, %s8
  $region1: #{net_forward.1} parent=0
    #allocation2 [shape = 'u8[1310720]{0}', space=vmem, size = 0x140000, scoped, tag = 'input window, operand 1, single buffered']
    #allocation3 [shape = 's32[1]{0}', space=sflag, size = 0x4, scoped, tag = 'scoped memory for net_forward.1']
    #allocation4 [shape = 'u8[4096]{0}', space=vmem, size = 0x1000, scoped, tag = 'input window, operand 2, single buffered']
    #allocation5 [shape = 's32[1]{0}', space=sflag, size = 0x4, scoped, tag = 'scoped memory for net_forward.1']
    #allocation6 [shape = 'u8[524288]{0}', space=vmem, size = 0x80000, scoped, tag = 'input window, operand 3, single buffered']
    #allocation7 [shape = 'u8[1024]{0}', space=vmem, size = 0x400, scoped, tag = 'input window, operand 4, single buffered']
    #allocation8 [shape = 's32[1]{0}', space=sflag, size = 0x4, scoped, tag = 'scoped memory for net_forward.1']
    #allocation9 [shape = 'u8[65536]{0}', space=vmem, size = 0x10000, scoped, tag = 'input window, operand 5, single buffered']
    #allocation10 [shape = 'u8[512]{0}', space=vmem, size = 0x400, scoped, tag = 'input window, operand 6, single buffered']
    #allocation11 [shape = 's32[1]{0}', space=sflag, size = 0x4, scoped, tag = 'scoped memory for net_forward.1']
    %12 = vsyncpa [#allocation3], 0
    %13 = vsyncpa [#allocation5], 0
    %14 = vsyncpa [#allocation8], 0
    %15 = vsyncpa [#allocation11], 0
    // Predicated region
    $region2: #{net_forward.1} parent=1 // pred_check
      _
    $region3: #{net_forward.1} parent=1 // pred_check_branch
      %17 = sbr.rel (0) target = $region5
    $region4: #{net_forward.1} parent=1 // pred_region
      _
    $region5: #{net_forward.1} parent=1 // pred_fallthru
      _
    // Predicated region
    $region6: #{net_forward.1} parent=1 // pred_check
      _
    $region7: #{net_forward.1} parent=1 // pred_check_branch
      %19 = sbr.rel (0) target = $region9
    $region8: #{net_forward.1} parent=1 // pred_region
      %s21 = ssub.s32 40960, 40960
      %22 = vsyncadd [#allocation3], %s21
      %s23 = sshll.u32 [#allocation2], 4
      %s24 = int_to_ptr.vmem [resolvable:$true] %s23
      %29 = dma.hbm_to_vmem [thread:$0]  %s1, 40960, %s24, [#allocation3], 512, 512, 32
    $region9: #{net_forward.1} parent=1 // pred_fallthru
      _
    // Predicated region
    $region10: #{net_forward.1} parent=1 // pred_check
      _
    $region11: #{net_forward.1} parent=1 // pred_check_branch
      %31 = sbr.rel (0) target = $region13
    $region12: #{net_forward.1} parent=1 // pred_region
      %s33 = ssub.s32 128, 128
      %34 = vsyncadd [#allocation5], %s33
      %s36 = sshll.u32 [#allocation4], 4
      %s37 = int_to_ptr.vmem [resolvable:$true] %s36
      %39 = dma.hbm_to_vmem [thread:$0]  %s2, 128, %s37, [#allocation5]
    $region13: #{net_forward.1} parent=1 // pred_fallthru
      _
    // Predicated region
    $region14: #{net_forward.1} parent=1 // pred_check
      _
    $region15: #{net_forward.1} parent=1 // pred_check_branch
      %41 = sbr.rel (0) target = $region17
    $region16: #{net_forward.1} parent=1 // pred_region
      %s43 = ssub.s32 16384, 16384
      %44 = vsyncadd [#allocation5], %s43
      %s45 = sshll.u32 [#allocation6], 4
      %s46 = int_to_ptr.vmem [resolvable:$true] %s45
      %51 = dma.hbm_to_vmem [thread:$0]  %s3, 16384, %s46, [#allocation5], 128, 128, 8
    $region17: #{net_forward.1} parent=1 // pred_fallthru
      _
    // Predicated region
    $region18: #{net_forward.1} parent=1 // pred_check
      _
    $region19: #{net_forward.1} parent=1 // pred_check_branch
      %53 = sbr.rel (0) target = $region21
    $region20: #{net_forward.1} parent=1 // pred_region
      %s55 = ssub.s32 32, 32
      %56 = vsyncadd [#allocation8], %s55
      %s58 = sshll.u32 [#allocation7], 4
      %s59 = int_to_ptr.vmem [resolvable:$true] %s58
      %61 = dma.hbm_to_vmem [thread:$0]  %s4, 32, %s59, [#allocation8]
    $region21: #{net_forward.1} parent=1 // pred_fallthru
      _
    // Predicated region
    $region22: #{net_forward.1} parent=1 // pred_check
      _
    $region23: #{net_forward.1} parent=1 // pred_check_branch
      %63 = sbr.rel (0) target = $region25
    $region24: #{net_forward.1} parent=1 // pred_region
      %s65 = ssub.s32 2048, 2048
      %66 = vsyncadd [#allocation8], %s65
      %s67 = sshll.u32 [#allocation9], 4
      %s68 = int_to_ptr.vmem [resolvable:$true] %s67
      %73 = dma.hbm_to_vmem [thread:$0]  %s5, 2048, %s68, [#allocation8], 64, 64, 4
    $region25: #{net_forward.1} parent=1 // pred_fallthru
      _
    // Predicated region
    $region26: #{net_forward.1} parent=1 // pred_check
      _
    $region27: #{net_forward.1} parent=1 // pred_check_branch
      %75 = sbr.rel (0) target = $region29
    $region28: #{net_forward.1} parent=1 // pred_region
      %s77 = ssub.s32 16, 16
      %78 = vsyncadd [#allocation11], %s77
      %s80 = sshll.u32 [#allocation10], 4
      %s81 = int_to_ptr.vmem [resolvable:$true] %s80
      %83 = dma.hbm_to_vmem [thread:$0]  %s6, 16, %s81, [#allocation11]
    $region29: #{net_forward.1} parent=1 // pred_fallthru
      _
    // Predicated region
    $region30: #{net_forward.1} parent=1 // pred_check
      _
    $region31: #{net_forward.1} parent=1 // pred_check_branch
      %85 = sbr.rel (0) target = $region33
    $region32: #{net_forward.1} parent=1 // pred_region
      %86 = dma.done [#allocation3], 40960
    $region33: #{net_forward.1} parent=1 // pred_fallthru
      _
    // Predicated region
    $region34: #{net_forward.1} parent=1 // pred_check
      _
    $region35: #{net_forward.1} parent=1 // pred_check_branch
      %88 = sbr.rel (0) target = $region37
    $region36: #{net_forward.1} parent=1 // pred_region
      %89 = dma.done [#allocation5], 128
    $region37: #{net_forward.1} parent=1 // pred_fallthru
      _
    // Predicated region
    $region38: #{net_forward.1} parent=1 // pred_check
      _
    $region39: #{net_forward.1} parent=1 // pred_check_branch
      %91 = sbr.rel (0) target = $region41
    $region40: #{net_forward.1} parent=1 // pred_region
      %92 = dma.done [#allocation5], 16384
    $region41: #{net_forward.1} parent=1 // pred_fallthru
      _
    // Predicated region
    $region42: #{net_forward.1} parent=1 // pred_check
      _
    $region43: #{net_forward.1} parent=1 // pred_check_branch
      %94 = sbr.rel (0) target = $region45
    $region44: #{net_forward.1} parent=1 // pred_region
      %95 = dma.done [#allocation8], 32
    $region45: #{net_forward.1} parent=1 // pred_fallthru
      _
    // Predicated region
    $region46: #{net_forward.1} parent=1 // pred_check
      _
    $region47: #{net_forward.1} parent=1 // pred_check_branch
      %97 = sbr.rel (0) target = $region49
    $region48: #{net_forward.1} parent=1 // pred_region
      %98 = dma.done [#allocation8], 2048
    $region49: #{net_forward.1} parent=1 // pred_fallthru
      _
    // Predicated region
    $region50: #{net_forward.1} parent=1 // pred_check
      _
    $region51: #{net_forward.1} parent=1 // pred_check_branch
      %100 = sbr.rel (0) target = $region53
    $region52: #{net_forward.1} parent=1 // pred_region
      %101 = dma.done [#allocation11], 16
    $region53: #{net_forward.1} parent=1 // pred_fallthru
      _
    %v103 = vld [vmem:[%s0] sm:$0xff]
    %v104 = vld [vmem:[%s0 + $0x8] sm:$0xff]
    %v105 = vld [vmem:[%s0 + $0x10] sm:$0xf]
    %v106 = vld [vmem:[%s0 + $0x14] sm:$0xff]
    %v107 = vld [vmem:[%s0 + $0x1c] sm:$0xff]
    %v108 = vld [vmem:[%s0 + $0x24] sm:$0xf]
    %v109 = vld [vmem:[#allocation2] sm:$0xff]
    %v110 = vld [vmem:[#allocation2 + $0x8] sm:$0xff]
    %v111 = vld [vmem:[#allocation2 + $0x10] sm:$0xff]
    %v112 = vld [vmem:[#allocation2 + $0x18] sm:$0xff]
    %v113 = vld [vmem:[#allocation2 + $0x20] sm:$0xff]
    %v114 = vld [vmem:[#allocation2 + $0x28] sm:$0xff]
    %v115 = vld [vmem:[#allocation2 + $0x30] sm:$0xff]
    %v116 = vld [vmem:[#allocation2 + $0x38] sm:$0xff]
    %v117 = vld [vmem:[#allocation2 + $0x40] sm:$0xff]
    %v118 = vld [vmem:[#allocation2 + $0x48] sm:$0xff]
    %v119 = vld [vmem:[#allocation2 + $0x50] sm:$0xff]
    %v120 = vld [vmem:[#allocation2 + $0x58] sm:$0xff]
    %v121 = vld [vmem:[#allocation2 + $0x60] sm:$0xff]
    %v122 = vld [vmem:[#allocation2 + $0x68] sm:$0xff]
    %v123 = vld [vmem:[#allocation2 + $0x70] sm:$0xff]
    %v124 = vld [vmem:[#allocation2 + $0x78] sm:$0xff]
    %v125 = vld [vmem:[#allocation2 + $0x80] sm:$0xff]
    %v126 = vld [vmem:[#allocation2 + $0x88] sm:$0xff]
    %v127 = vld [vmem:[#allocation2 + $0x90] sm:$0xff]
    %v128 = vld [vmem:[#allocation2 + $0x98] sm:$0xff]
    %v129 = vld [vmem:[#allocation2 + $0xa0] sm:$0xff]
    %v130 = vld [vmem:[#allocation2 + $0xa8] sm:$0xff]
    %v131 = vld [vmem:[#allocation2 + $0xb0] sm:$0xff]
    %v132 = vld [vmem:[#allocation2 + $0xb8] sm:$0xff]
    %v133 = vld [vmem:[#allocation2 + $0xc0] sm:$0xff]
    %v134 = vld [vmem:[#allocation2 + $0xc8] sm:$0xff]
    %v135 = vld [vmem:[#allocation2 + $0xd0] sm:$0xff]
    %v136 = vld [vmem:[#allocation2 + $0xd8] sm:$0xff]
    %v137 = vld [vmem:[#allocation2 + $0xe0] sm:$0xff]
    %v138 = vld [vmem:[#allocation2 + $0xe8] sm:$0xff]
    %v139 = vld [vmem:[#allocation2 + $0xf0] sm:$0xff]
    %v140 = vld [vmem:[#allocation2 + $0xf8] sm:$0xff]
    %v141 = vld [vmem:[#allocation2 + $0x100] sm:$0xff]
    %v142 = vld [vmem:[#allocation2 + $0x108] sm:$0xff]
    %v143 = vld [vmem:[#allocation2 + $0x110] sm:$0xff]
    %v144 = vld [vmem:[#allocation2 + $0x118] sm:$0xff]
    %v145 = vld [vmem:[#allocation2 + $0x120] sm:$0xff]
    %v146 = vld [vmem:[#allocation2 + $0x128] sm:$0xff]
    %v147 = vld [vmem:[#allocation2 + $0x130] sm:$0xff]
    %v148 = vld [vmem:[#allocation2 + $0x138] sm:$0xff]
    %v149 = vld [vmem:[#allocation2 + $0x140] sm:$0xff]
    %v150 = vld [vmem:[#allocation2 + $0x148] sm:$0xff]
    %v151 = vld [vmem:[#allocation2 + $0x150] sm:$0xff]
    %v152 = vld [vmem:[#allocation2 + $0x158] sm:$0xff]
    %v153 = vld [vmem:[#allocation2 + $0x160] sm:$0xff]
    %v154 = vld [vmem:[#allocation2 + $0x168] sm:$0xff]
    %v155 = vld [vmem:[#allocation2 + $0x170] sm:$0xff]
    %v156 = vld [vmem:[#allocation2 + $0x178] sm:$0xff]
    %v157 = vld [vmem:[#allocation2 + $0x180] sm:$0xff]
    %v158 = vld [vmem:[#allocation2 + $0x188] sm:$0xff]
    %v159 = vld [vmem:[#allocation2 + $0x190] sm:$0xff]
    %v160 = vld [vmem:[#allocation2 + $0x198] sm:$0xff]
    %v161 = vld [vmem:[#allocation2 + $0x1a0] sm:$0xff]
    %v162 = vld [vmem:[#allocation2 + $0x1a8] sm:$0xff]
    %v163 = vld [vmem:[#allocation2 + $0x1b0] sm:$0xff]
    %v164 = vld [vmem:[#allocation2 + $0x1b8] sm:$0xff]
    %v165 = vld [vmem:[#allocation2 + $0x1c0] sm:$0xff]
    %v166 = vld [vmem:[#allocation2 + $0x1c8] sm:$0xff]
    %v167 = vld [vmem:[#allocation2 + $0x1d0] sm:$0xff]
    %v168 = vld [vmem:[#allocation2 + $0x1d8] sm:$0xff]
    %v169 = vld [vmem:[#allocation2 + $0x1e0] sm:$0xff]
    %v170 = vld [vmem:[#allocation2 + $0x1e8] sm:$0xff]
    %v171 = vld [vmem:[#allocation2 + $0x1f0] sm:$0xff]
    %v172 = vld [vmem:[#allocation2 + $0x1f8] sm:$0xff]
    %v173 = vld [vmem:[#allocation2 + $0x200] sm:$0xff]
    %v174 = vld [vmem:[#allocation2 + $0x208] sm:$0xff]
    %v175 = vld [vmem:[#allocation2 + $0x210] sm:$0xff]
    %v176 = vld [vmem:[#allocation2 + $0x218] sm:$0xff]
    %v177 = vld [vmem:[#allocation2 + $0x220] sm:$0xff]
    %v178 = vld [vmem:[#allocation2 + $0x228] sm:$0xff]
    %v179 = vld [vmem:[#allocation2 + $0x230] sm:$0xff]
    %v180 = vld [vmem:[#allocation2 + $0x238] sm:$0xff]
    %v181 = vld [vmem:[#allocation2 + $0x240] sm:$0xff]
    %v182 = vld [vmem:[#allocation2 + $0x248] sm:$0xff]
    %v183 = vld [vmem:[#allocation2 + $0x250] sm:$0xff]
    %v184 = vld [vmem:[#allocation2 + $0x258] sm:$0xff]
    %v185 = vld [vmem:[#allocation2 + $0x260] sm:$0xff]
    %v186 = vld [vmem:[#allocation2 + $0x268] sm:$0xff]
    %v187 = vld [vmem:[#allocation2 + $0x270] sm:$0xff]
    %v188 = vld [vmem:[#allocation2 + $0x278] sm:$0xff]
    %v189 = vld [vmem:[#allocation2 + $0x280] sm:$0xff]
    %v190 = vld [vmem:[#allocation2 + $0x288] sm:$0xff]
    %v191 = vld [vmem:[#allocation2 + $0x290] sm:$0xff]
    %v192 = vld [vmem:[#allocation2 + $0x298] sm:$0xff]
    %v193 = vld [vmem:[#allocation2 + $0x2a0] sm:$0xff]
    %v194 = vld [vmem:[#allocation2 + $0x2a8] sm:$0xff]
    %v195 = vld [vmem:[#allocation2 + $0x2b0] sm:$0xff]
    %v196 = vld [vmem:[#allocation2 + $0x2b8] sm:$0xff]
    %v197 = vld [vmem:[#allocation2 + $0x2c0] sm:$0xff]
    %v198 = vld [vmem:[#allocation2 + $0x2c8] sm:$0xff]
    %v199 = vld [vmem:[#allocation2 + $0x2d0] sm:$0xff]
    %v200 = vld [vmem:[#allocation2 + $0x2d8] sm:$0xff]
    %v201 = vld [vmem:[#allocation2 + $0x2e0] sm:$0xff]
    %v202 = vld [vmem:[#allocation2 + $0x2e8] sm:$0xff]
    %v203 = vld [vmem:[#allocation2 + $0x2f0] sm:$0xff]
    %v204 = vld [vmem:[#allocation2 + $0x2f8] sm:$0xff]
    %v205 = vld [vmem:[#allocation2 + $0x300] sm:$0xff]
    %v206 = vld [vmem:[#allocation2 + $0x308] sm:$0xff]
    %v207 = vld [vmem:[#allocation2 + $0x310] sm:$0xff]
    %v208 = vld [vmem:[#allocation2 + $0x318] sm:$0xff]
    %v209 = vld [vmem:[#allocation2 + $0x320] sm:$0xff]
    %v210 = vld [vmem:[#allocation2 + $0x328] sm:$0xff]
    %v211 = vld [vmem:[#allocation2 + $0x330] sm:$0xff]
    %v212 = vld [vmem:[#allocation2 + $0x338] sm:$0xff]
    %v213 = vld [vmem:[#allocation2 + $0x340] sm:$0xff]
    %v214 = vld [vmem:[#allocation2 + $0x348] sm:$0xff]
    %v215 = vld [vmem:[#allocation2 + $0x350] sm:$0xff]
    %v216 = vld [vmem:[#allocation2 + $0x358] sm:$0xff]
    %v217 = vld [vmem:[#allocation2 + $0x360] sm:$0xff]
    %v218 = vld [vmem:[#allocation2 + $0x368] sm:$0xff]
    %v219 = vld [vmem:[#allocation2 + $0x370] sm:$0xff]
    %v220 = vld [vmem:[#allocation2 + $0x378] sm:$0xff]
    %v221 = vld [vmem:[#allocation2 + $0x380] sm:$0xff]
    %v222 = vld [vmem:[#allocation2 + $0x388] sm:$0xff]
    %v223 = vld [vmem:[#allocation2 + $0x390] sm:$0xff]
    %v224 = vld [vmem:[#allocation2 + $0x398] sm:$0xff]
    %v225 = vld [vmem:[#allocation2 + $0x3a0] sm:$0xff]
    %v226 = vld [vmem:[#allocation2 + $0x3a8] sm:$0xff]
    %v227 = vld [vmem:[#allocation2 + $0x3b0] sm:$0xff]
    %v228 = vld [vmem:[#allocation2 + $0x3b8] sm:$0xff]
    %v229 = vld [vmem:[#allocation2 + $0x3c0] sm:$0xff]
    %v230 = vld [vmem:[#allocation2 + $0x3c8] sm:$0xff]
    %v231 = vld [vmem:[#allocation2 + $0x3d0] sm:$0xff]
    %v232 = vld [vmem:[#allocation2 + $0x3d8] sm:$0xff]
    %v233 = vld [vmem:[#allocation2 + $0x3e0] sm:$0xff]
    %v234 = vld [vmem:[#allocation2 + $0x3e8] sm:$0xff]
    %v235 = vld [vmem:[#allocation2 + $0x3f0] sm:$0xff]
    %v236 = vld [vmem:[#allocation2 + $0x3f8] sm:$0xff]
    %v237 = vld [vmem:[#allocation2 + $0x400] sm:$0xff]
    %v238 = vld [vmem:[#allocation2 + $0x408] sm:$0xff]
    %v239 = vld [vmem:[#allocation2 + $0x410] sm:$0xff]
    %v240 = vld [vmem:[#allocation2 + $0x418] sm:$0xff]
    %v241 = vld [vmem:[#allocation2 + $0x420] sm:$0xff]
    %v242 = vld [vmem:[#allocation2 + $0x428] sm:$0xff]
    %v243 = vld [vmem:[#allocation2 + $0x430] sm:$0xff]
    %v244 = vld [vmem:[#allocation2 + $0x438] sm:$0xff]
    %v245 = vld [vmem:[#allocation2 + $0x440] sm:$0xff]
    %v246 = vld [vmem:[#allocation2 + $0x448] sm:$0xff]
    %v247 = vld [vmem:[#allocation2 + $0x450] sm:$0xff]
    %v248 = vld [vmem:[#allocation2 + $0x458] sm:$0xff]
    %v249 = vld [vmem:[#allocation2 + $0x460] sm:$0xff]
    %v250 = vld [vmem:[#allocation2 + $0x468] sm:$0xff]
    %v251 = vld [vmem:[#allocation2 + $0x470] sm:$0xff]
    %v252 = vld [vmem:[#allocation2 + $0x478] sm:$0xff]
    %v253 = vld [vmem:[#allocation2 + $0x480] sm:$0xff]
    %v254 = vld [vmem:[#allocation2 + $0x488] sm:$0xff]
    %v255 = vld [vmem:[#allocation2 + $0x490] sm:$0xff]
    %v256 = vld [vmem:[#allocation2 + $0x498] sm:$0xff]
    %v257 = vld [vmem:[#allocation2 + $0x4a0] sm:$0xff]
    %v258 = vld [vmem:[#allocation2 + $0x4a8] sm:$0xff]
    %v259 = vld [vmem:[#allocation2 + $0x4b0] sm:$0xff]
    %v260 = vld [vmem:[#allocation2 + $0x4b8] sm:$0xff]
    %v261 = vld [vmem:[#allocation2 + $0x4c0] sm:$0xff]
    %v262 = vld [vmem:[#allocation2 + $0x4c8] sm:$0xff]
    %v263 = vld [vmem:[#allocation2 + $0x4d0] sm:$0xff]
    %v264 = vld [vmem:[#allocation2 + $0x4d8] sm:$0xff]
    %v265 = vld [vmem:[#allocation2 + $0x4e0] sm:$0xff]
    %v266 = vld [vmem:[#allocation2 + $0x4e8] sm:$0xff]
    %v267 = vld [vmem:[#allocation2 + $0x4f0] sm:$0xff]
    %v268 = vld [vmem:[#allocation2 + $0x4f8] sm:$0xff]
    %v269 = vld [vmem:[#allocation2 + $0x500] sm:$0xff]
    %v270 = vld [vmem:[#allocation2 + $0x508] sm:$0xff]
    %v271 = vld [vmem:[#allocation2 + $0x510] sm:$0xff]
    %v272 = vld [vmem:[#allocation2 + $0x518] sm:$0xff]
    %v273 = vld [vmem:[#allocation2 + $0x520] sm:$0xff]
    %v274 = vld [vmem:[#allocation2 + $0x528] sm:$0xff]
    %v275 = vld [vmem:[#allocation2 + $0x530] sm:$0xff]
    %v276 = vld [vmem:[#allocation2 + $0x538] sm:$0xff]
    %v277 = vld [vmem:[#allocation2 + $0x540] sm:$0xff]
    %v278 = vld [vmem:[#allocation2 + $0x548] sm:$0xff]
    %v279 = vld [vmem:[#allocation2 + $0x550] sm:$0xff]
    %v280 = vld [vmem:[#allocation2 + $0x558] sm:$0xff]
    %v281 = vld [vmem:[#allocation2 + $0x560] sm:$0xff]
    %v282 = vld [vmem:[#allocation2 + $0x568] sm:$0xff]
    %v283 = vld [vmem:[#allocation2 + $0x570] sm:$0xff]
    %v284 = vld [vmem:[#allocation2 + $0x578] sm:$0xff]
    %v285 = vld [vmem:[#allocation2 + $0x580] sm:$0xff]
    %v286 = vld [vmem:[#allocation2 + $0x588] sm:$0xff]
    %v287 = vld [vmem:[#allocation2 + $0x590] sm:$0xff]
    %v288 = vld [vmem:[#allocation2 + $0x598] sm:$0xff]
    %v289 = vld [vmem:[#allocation2 + $0x5a0] sm:$0xff]
    %v290 = vld [vmem:[#allocation2 + $0x5a8] sm:$0xff]
    %v291 = vld [vmem:[#allocation2 + $0x5b0] sm:$0xff]
    %v292 = vld [vmem:[#allocation2 + $0x5b8] sm:$0xff]
    %v293 = vld [vmem:[#allocation2 + $0x5c0] sm:$0xff]
    %v294 = vld [vmem:[#allocation2 + $0x5c8] sm:$0xff]
    %v295 = vld [vmem:[#allocation2 + $0x5d0] sm:$0xff]
    %v296 = vld [vmem:[#allocation2 + $0x5d8] sm:$0xff]
    %v297 = vld [vmem:[#allocation2 + $0x5e0] sm:$0xff]
    %v298 = vld [vmem:[#allocation2 + $0x5e8] sm:$0xff]
    %v299 = vld [vmem:[#allocation2 + $0x5f0] sm:$0xff]
    %v300 = vld [vmem:[#allocation2 + $0x5f8] sm:$0xff]
    %v301 = vld [vmem:[#allocation2 + $0x600] sm:$0xff]
    %v302 = vld [vmem:[#allocation2 + $0x608] sm:$0xff]
    %v303 = vld [vmem:[#allocation2 + $0x610] sm:$0xff]
    %v304 = vld [vmem:[#allocation2 + $0x618] sm:$0xff]
    %v305 = vld [vmem:[#allocation2 + $0x620] sm:$0xff]
    %v306 = vld [vmem:[#allocation2 + $0x628] sm:$0xff]
    %v307 = vld [vmem:[#allocation2 + $0x630] sm:$0xff]
    %v308 = vld [vmem:[#allocation2 + $0x638] sm:$0xff]
    %v309 = vld [vmem:[#allocation2 + $0x640] sm:$0xff]
    %v310 = vld [vmem:[#allocation2 + $0x648] sm:$0xff]
    %v311 = vld [vmem:[#allocation2 + $0x650] sm:$0xff]
    %v312 = vld [vmem:[#allocation2 + $0x658] sm:$0xff]
    %v313 = vld [vmem:[#allocation2 + $0x660] sm:$0xff]
    %v314 = vld [vmem:[#allocation2 + $0x668] sm:$0xff]
    %v315 = vld [vmem:[#allocation2 + $0x670] sm:$0xff]
    %v316 = vld [vmem:[#allocation2 + $0x678] sm:$0xff]
    %v317 = vld [vmem:[#allocation2 + $0x680] sm:$0xff]
    %v318 = vld [vmem:[#allocation2 + $0x688] sm:$0xff]
    %v319 = vld [vmem:[#allocation2 + $0x690] sm:$0xff]
    %v320 = vld [vmem:[#allocation2 + $0x698] sm:$0xff]
    %v321 = vld [vmem:[#allocation2 + $0x6a0] sm:$0xff]
    %v322 = vld [vmem:[#allocation2 + $0x6a8] sm:$0xff]
    %v323 = vld [vmem:[#allocation2 + $0x6b0] sm:$0xff]
    %v324 = vld [vmem:[#allocation2 + $0x6b8] sm:$0xff]
    %v325 = vld [vmem:[#allocation2 + $0x6c0] sm:$0xff]
    %v326 = vld [vmem:[#allocation2 + $0x6c8] sm:$0xff]
    %v327 = vld [vmem:[#allocation2 + $0x6d0] sm:$0xff]
    %v328 = vld [vmem:[#allocation2 + $0x6d8] sm:$0xff]
    %v329 = vld [vmem:[#allocation2 + $0x6e0] sm:$0xff]
    %v330 = vld [vmem:[#allocation2 + $0x6e8] sm:$0xff]
    %v331 = vld [vmem:[#allocation2 + $0x6f0] sm:$0xff]
    %v332 = vld [vmem:[#allocation2 + $0x6f8] sm:$0xff]
    %v333 = vld [vmem:[#allocation2 + $0x700] sm:$0xff]
    %v334 = vld [vmem:[#allocation2 + $0x708] sm:$0xff]
    %v335 = vld [vmem:[#allocation2 + $0x710] sm:$0xff]
    %v336 = vld [vmem:[#allocation2 + $0x718] sm:$0xff]
    %v337 = vld [vmem:[#allocation2 + $0x720] sm:$0xff]
    %v338 = vld [vmem:[#allocation2 + $0x728] sm:$0xff]
    %v339 = vld [vmem:[#allocation2 + $0x730] sm:$0xff]
    %v340 = vld [vmem:[#allocation2 + $0x738] sm:$0xff]
    %v341 = vld [vmem:[#allocation2 + $0x740] sm:$0xff]
    %v342 = vld [vmem:[#allocation2 + $0x748] sm:$0xff]
    %v343 = vld [vmem:[#allocation2 + $0x750] sm:$0xff]
    %v344 = vld [vmem:[#allocation2 + $0x758] sm:$0xff]
    %v345 = vld [vmem:[#allocation2 + $0x760] sm:$0xff]
    %v346 = vld [vmem:[#allocation2 + $0x768] sm:$0xff]
    %v347 = vld [vmem:[#allocation2 + $0x770] sm:$0xff]
    %v348 = vld [vmem:[#allocation2 + $0x778] sm:$0xff]
    %v349 = vld [vmem:[#allocation2 + $0x780] sm:$0xff]
    %v350 = vld [vmem:[#allocation2 + $0x788] sm:$0xff]
    %v351 = vld [vmem:[#allocation2 + $0x790] sm:$0xff]
    %v352 = vld [vmem:[#allocation2 + $0x798] sm:$0xff]
    %v353 = vld [vmem:[#allocation2 + $0x7a0] sm:$0xff]
    %v354 = vld [vmem:[#allocation2 + $0x7a8] sm:$0xff]
    %v355 = vld [vmem:[#allocation2 + $0x7b0] sm:$0xff]
    %v356 = vld [vmem:[#allocation2 + $0x7b8] sm:$0xff]
    %v357 = vld [vmem:[#allocation2 + $0x7c0] sm:$0xff]
    %v358 = vld [vmem:[#allocation2 + $0x7c8] sm:$0xff]
    %v359 = vld [vmem:[#allocation2 + $0x7d0] sm:$0xff]
    %v360 = vld [vmem:[#allocation2 + $0x7d8] sm:$0xff]
    %v361 = vld [vmem:[#allocation2 + $0x7e0] sm:$0xff]
    %v362 = vld [vmem:[#allocation2 + $0x7e8] sm:$0xff]
    %v363 = vld [vmem:[#allocation2 + $0x7f0] sm:$0xff]
    %v364 = vld [vmem:[#allocation2 + $0x7f8] sm:$0xff]
    %v365 = vld [vmem:[#allocation2 + $0x800] sm:$0xff]
    %v366 = vld [vmem:[#allocation2 + $0x808] sm:$0xff]
    %v367 = vld [vmem:[#allocation2 + $0x810] sm:$0xff]
    %v368 = vld [vmem:[#allocation2 + $0x818] sm:$0xff]
    %v369 = vld [vmem:[#allocation2 + $0x820] sm:$0xff]
    %v370 = vld [vmem:[#allocation2 + $0x828] sm:$0xff]
    %v371 = vld [vmem:[#allocation2 + $0x830] sm:$0xff]
    %v372 = vld [vmem:[#allocation2 + $0x838] sm:$0xff]
    %v373 = vld [vmem:[#allocation2 + $0x840] sm:$0xff]
    %v374 = vld [vmem:[#allocation2 + $0x848] sm:$0xff]
    %v375 = vld [vmem:[#allocation2 + $0x850] sm:$0xff]
    %v376 = vld [vmem:[#allocation2 + $0x858] sm:$0xff]
    %v377 = vld [vmem:[#allocation2 + $0x860] sm:$0xff]
    %v378 = vld [vmem:[#allocation2 + $0x868] sm:$0xff]
    %v379 = vld [vmem:[#allocation2 + $0x870] sm:$0xff]
    %v380 = vld [vmem:[#allocation2 + $0x878] sm:$0xff]
    %v381 = vld [vmem:[#allocation2 + $0x880] sm:$0xff]
    %v382 = vld [vmem:[#allocation2 + $0x888] sm:$0xff]
    %v383 = vld [vmem:[#allocation2 + $0x890] sm:$0xff]
    %v384 = vld [vmem:[#allocation2 + $0x898] sm:$0xff]
    %v385 = vld [vmem:[#allocation2 + $0x8a0] sm:$0xff]
    %v386 = vld [vmem:[#allocation2 + $0x8a8] sm:$0xff]
    %v387 = vld [vmem:[#allocation2 + $0x8b0] sm:$0xff]
    %v388 = vld [vmem:[#allocation2 + $0x8b8] sm:$0xff]
    %v389 = vld [vmem:[#allocation2 + $0x8c0] sm:$0xff]
    %v390 = vld [vmem:[#allocation2 + $0x8c8] sm:$0xff]
    %v391 = vld [vmem:[#allocation2 + $0x8d0] sm:$0xff]
    %v392 = vld [vmem:[#allocation2 + $0x8d8] sm:$0xff]
    %v393 = vld [vmem:[#allocation2 + $0x8e0] sm:$0xff]
    %v394 = vld [vmem:[#allocation2 + $0x8e8] sm:$0xff]
    %v395 = vld [vmem:[#allocation2 + $0x8f0] sm:$0xff]
    %v396 = vld [vmem:[#allocation2 + $0x8f8] sm:$0xff]
    %v397 = vld [vmem:[#allocation2 + $0x900] sm:$0xff]
    %v398 = vld [vmem:[#allocation2 + $0x908] sm:$0xff]
    %v399 = vld [vmem:[#allocation2 + $0x910] sm:$0xff]
    %v400 = vld [vmem:[#allocation2 + $0x918] sm:$0xff]
    %v401 = vld [vmem:[#allocation2 + $0x920] sm:$0xff]
    %v402 = vld [vmem:[#allocation2 + $0x928] sm:$0xff]
    %v403 = vld [vmem:[#allocation2 + $0x930] sm:$0xff]
    %v404 = vld [vmem:[#allocation2 + $0x938] sm:$0xff]
    %v405 = vld [vmem:[#allocation2 + $0x940] sm:$0xff]
    %v406 = vld [vmem:[#allocation2 + $0x948] sm:$0xff]
    %v407 = vld [vmem:[#allocation2 + $0x950] sm:$0xff]
    %v408 = vld [vmem:[#allocation2 + $0x958] sm:$0xff]
    %v409 = vld [vmem:[#allocation2 + $0x960] sm:$0xff]
    %v410 = vld [vmem:[#allocation2 + $0x968] sm:$0xff]
    %v411 = vld [vmem:[#allocation2 + $0x970] sm:$0xff]
    %v412 = vld [vmem:[#allocation2 + $0x978] sm:$0xff]
    %v413 = vld [vmem:[#allocation2 + $0x980] sm:$0xff]
    %v414 = vld [vmem:[#allocation2 + $0x988] sm:$0xff]
    %v415 = vld [vmem:[#allocation2 + $0x990] sm:$0xff]
    %v416 = vld [vmem:[#allocation2 + $0x998] sm:$0xff]
    %v417 = vld [vmem:[#allocation2 + $0x9a0] sm:$0xff]
    %v418 = vld [vmem:[#allocation2 + $0x9a8] sm:$0xff]
    %v419 = vld [vmem:[#allocation2 + $0x9b0] sm:$0xff]
    %v420 = vld [vmem:[#allocation2 + $0x9b8] sm:$0xff]
    %v421 = vld [vmem:[#allocation2 + $0x9c0] sm:$0xff]
    %v422 = vld [vmem:[#allocation2 + $0x9c8] sm:$0xff]
    %v423 = vld [vmem:[#allocation2 + $0x9d0] sm:$0xff]
    %v424 = vld [vmem:[#allocation2 + $0x9d8] sm:$0xff]
    %v425 = vld [vmem:[#allocation2 + $0x9e0] sm:$0xff]
    %v426 = vld [vmem:[#allocation2 + $0x9e8] sm:$0xff]
    %v427 = vld [vmem:[#allocation2 + $0x9f0] sm:$0xff]
    %v428 = vld [vmem:[#allocation2 + $0x9f8] sm:$0xff]
    %v429 = vld [vmem:[#allocation4] sm:$0xff]
    %v431 = vlaneseq
    %v432 = vshrl.u32 %v431, 7
    %v433 = vsub.s32 0, %v432
    %v434 = vrot.slane %v429, %v433
    %v435 = vlaneseq
    %v436 = vshrl.u32 %v435, 7
    %v437 = vsub.s32 1, %v436
    %v438 = vrot.slane %v429, %v437
    %v439 = vlaneseq
    %v440 = vshrl.u32 %v439, 7
    %v441 = vsub.s32 2, %v440
    %v442 = vrot.slane %v429, %v441
    %v443 = vlaneseq
    %v444 = vshrl.u32 %v443, 7
    %v445 = vsub.s32 3, %v444
    %v446 = vrot.slane %v429, %v445
    %v447 = vlaneseq
    %v448 = vshrl.u32 %v447, 7
    %v449 = vsub.s32 4, %v448
    %v450 = vrot.slane %v429, %v449
    %v451 = vlaneseq
    %v452 = vshrl.u32 %v451, 7
    %v453 = vsub.s32 5, %v452
    %v454 = vrot.slane %v429, %v453
    %v455 = vlaneseq
    %v456 = vshrl.u32 %v455, 7
    %v457 = vsub.s32 6, %v456
    %v458 = vrot.slane %v429, %v457
    %v459 = vlaneseq
    %v460 = vshrl.u32 %v459, 7
    %v461 = vsub.s32 7, %v460
    %v462 = vrot.slane %v429, %v461
    %v477 = vunpack.c.l.b16 %v103
    %v478 = vunpack.c.h.b16 %v103
    %v479 = vunpack.c.l.b16 %v104
    %v480 = vunpack.c.h.b16 %v104
    %v481 = vunpack.c.l.b16 %v105
    %v482 = vunpack.c.l.b16 %v106
    %v483 = vunpack.c.h.b16 %v106
    %v484 = vunpack.c.l.b16 %v107
    %v485 = vunpack.c.h.b16 %v107
    %v486 = vunpack.c.l.b16 %v108
    %v487 = vpack.c.b16 %v482, %v477
    %v488 = vpack.c.b16 %v483, %v478
    %v489 = vpack.c.b16 %v484, %v479
    %v490 = vpack.c.b16 %v485, %v480
    %v491 = vpack.c.b16 %v486, %v481
    %v817 = vunpack.c.l.b16 %v109
    %v818 = vunpack.c.h.b16 %v109
    %v819 = vunpack.c.l.b16 %v110
    %v820 = vunpack.c.h.b16 %v110
    %v821 = vunpack.c.l.b16 %v111
    %v822 = vunpack.c.h.b16 %v111
    %v823 = vunpack.c.l.b16 %v112
    %v824 = vunpack.c.h.b16 %v112
    %v825 = vunpack.c.l.b16 %v113
    %v826 = vunpack.c.h.b16 %v113
    %v827 = vunpack.c.l.b16 %v114
    %v828 = vunpack.c.h.b16 %v114
    %v829 = vunpack.c.l.b16 %v115
    %v830 = vunpack.c.h.b16 %v115
    %v831 = vunpack.c.l.b16 %v116
    %v832 = vunpack.c.h.b16 %v116
    %v833 = vunpack.c.l.b16 %v117
    %v834 = vunpack.c.h.b16 %v117
    %v835 = vunpack.c.l.b16 %v118
    %v836 = vunpack.c.h.b16 %v118
    %v837 = vunpack.c.l.b16 %v119
    %v838 = vunpack.c.h.b16 %v119
    %v839 = vunpack.c.l.b16 %v120
    %v840 = vunpack.c.h.b16 %v120
    %v841 = vunpack.c.l.b16 %v121
    %v842 = vunpack.c.h.b16 %v121
    %v843 = vunpack.c.l.b16 %v122
    %v844 = vunpack.c.h.b16 %v122
    %v845 = vunpack.c.l.b16 %v123
    %v846 = vunpack.c.h.b16 %v123
    %v847 = vunpack.c.l.b16 %v124
    %v848 = vunpack.c.h.b16 %v124
    %v849 = vunpack.c.l.b16 %v125
    %v850 = vunpack.c.h.b16 %v125
    %v851 = vunpack.c.l.b16 %v126
    %v852 = vunpack.c.h.b16 %v126
    %v853 = vunpack.c.l.b16 %v127
    %v854 = vunpack.c.h.b16 %v127
    %v855 = vunpack.c.l.b16 %v128
    %v856 = vunpack.c.h.b16 %v128
    %v857 = vunpack.c.l.b16 %v129
    %v858 = vunpack.c.h.b16 %v129
    %v859 = vunpack.c.l.b16 %v130
    %v860 = vunpack.c.h.b16 %v130
    %v861 = vunpack.c.l.b16 %v131
    %v862 = vunpack.c.h.b16 %v131
    %v863 = vunpack.c.l.b16 %v132
    %v864 = vunpack.c.h.b16 %v132
    %v865 = vunpack.c.l.b16 %v133
    %v866 = vunpack.c.h.b16 %v133
    %v867 = vunpack.c.l.b16 %v134
    %v868 = vunpack.c.h.b16 %v134
    %v869 = vunpack.c.l.b16 %v135
    %v870 = vunpack.c.h.b16 %v135
    %v871 = vunpack.c.l.b16 %v136
    %v872 = vunpack.c.h.b16 %v136
    %v873 = vunpack.c.l.b16 %v137
    %v874 = vunpack.c.h.b16 %v137
    %v875 = vunpack.c.l.b16 %v138
    %v876 = vunpack.c.h.b16 %v138
    %v877 = vunpack.c.l.b16 %v139
    %v878 = vunpack.c.h.b16 %v139
    %v879 = vunpack.c.l.b16 %v140
    %v880 = vunpack.c.h.b16 %v140
    %v881 = vunpack.c.l.b16 %v141
    %v882 = vunpack.c.h.b16 %v141
    %v883 = vunpack.c.l.b16 %v142
    %v884 = vunpack.c.h.b16 %v142
    %v885 = vunpack.c.l.b16 %v143
    %v886 = vunpack.c.h.b16 %v143
    %v887 = vunpack.c.l.b16 %v144
    %v888 = vunpack.c.h.b16 %v144
    %v889 = vunpack.c.l.b16 %v145
    %v890 = vunpack.c.h.b16 %v145
    %v891 = vunpack.c.l.b16 %v146
    %v892 = vunpack.c.h.b16 %v146
    %v893 = vunpack.c.l.b16 %v147
    %v894 = vunpack.c.h.b16 %v147
    %v895 = vunpack.c.l.b16 %v148
    %v896 = vunpack.c.h.b16 %v148
    %v897 = vunpack.c.l.b16 %v149
    %v898 = vunpack.c.h.b16 %v149
    %v899 = vunpack.c.l.b16 %v150
    %v900 = vunpack.c.h.b16 %v150
    %v901 = vunpack.c.l.b16 %v151
    %v902 = vunpack.c.h.b16 %v151
    %v903 = vunpack.c.l.b16 %v152
    %v904 = vunpack.c.h.b16 %v152
    %v905 = vunpack.c.l.b16 %v153
    %v906 = vunpack.c.h.b16 %v153
    %v907 = vunpack.c.l.b16 %v154
    %v908 = vunpack.c.h.b16 %v154
    %v909 = vunpack.c.l.b16 %v155
    %v910 = vunpack.c.h.b16 %v155
    %v911 = vunpack.c.l.b16 %v156
    %v912 = vunpack.c.h.b16 %v156
    %v913 = vunpack.c.l.b16 %v157
    %v914 = vunpack.c.h.b16 %v157
    %v915 = vunpack.c.l.b16 %v158
    %v916 = vunpack.c.h.b16 %v158
    %v917 = vunpack.c.l.b16 %v159
    %v918 = vunpack.c.h.b16 %v159
    %v919 = vunpack.c.l.b16 %v160
    %v920 = vunpack.c.h.b16 %v160
    %v921 = vunpack.c.l.b16 %v161
    %v922 = vunpack.c.h.b16 %v161
    %v923 = vunpack.c.l.b16 %v162
    %v924 = vunpack.c.h.b16 %v162
    %v925 = vunpack.c.l.b16 %v163
    %v926 = vunpack.c.h.b16 %v163
    %v927 = vunpack.c.l.b16 %v164
    %v928 = vunpack.c.h.b16 %v164
    %v929 = vunpack.c.l.b16 %v165
    %v930 = vunpack.c.h.b16 %v165
    %v931 = vunpack.c.l.b16 %v166
    %v932 = vunpack.c.h.b16 %v166
    %v933 = vunpack.c.l.b16 %v167
    %v934 = vunpack.c.h.b16 %v167
    %v935 = vunpack.c.l.b16 %v168
    %v936 = vunpack.c.h.b16 %v168
    %v937 = vunpack.c.l.b16 %v169
    %v938 = vunpack.c.h.b16 %v169
    %v939 = vunpack.c.l.b16 %v170
    %v940 = vunpack.c.h.b16 %v170
    %v941 = vunpack.c.l.b16 %v171
    %v942 = vunpack.c.h.b16 %v171
    %v943 = vunpack.c.l.b16 %v172
    %v944 = vunpack.c.h.b16 %v172
    %v945 = vunpack.c.l.b16 %v173
    %v946 = vunpack.c.h.b16 %v173
    %v947 = vunpack.c.l.b16 %v174
    %v948 = vunpack.c.h.b16 %v174
    %v949 = vunpack.c.l.b16 %v175
    %v950 = vunpack.c.h.b16 %v175
    %v951 = vunpack.c.l.b16 %v176
    %v952 = vunpack.c.h.b16 %v176
    %v953 = vunpack.c.l.b16 %v177
    %v954 = vunpack.c.h.b16 %v177
    %v955 = vunpack.c.l.b16 %v178
    %v956 = vunpack.c.h.b16 %v178
    %v957 = vunpack.c.l.b16 %v179
    %v958 = vunpack.c.h.b16 %v179
    %v959 = vunpack.c.l.b16 %v180
    %v960 = vunpack.c.h.b16 %v180
    %v961 = vunpack.c.l.b16 %v181
    %v962 = vunpack.c.h.b16 %v181
    %v963 = vunpack.c.l.b16 %v182
    %v964 = vunpack.c.h.b16 %v182
    %v965 = vunpack.c.l.b16 %v183
    %v966 = vunpack.c.h.b16 %v183
    %v967 = vunpack.c.l.b16 %v184
    %v968 = vunpack.c.h.b16 %v184
    %v969 = vunpack.c.l.b16 %v185
    %v970 = vunpack.c.h.b16 %v185
    %v971 = vunpack.c.l.b16 %v186
    %v972 = vunpack.c.h.b16 %v186
    %v973 = vunpack.c.l.b16 %v187
    %v974 = vunpack.c.h.b16 %v187
    %v975 = vunpack.c.l.b16 %v188
    %v976 = vunpack.c.h.b16 %v188
    %v977 = vunpack.c.l.b16 %v189
    %v978 = vunpack.c.h.b16 %v189
    %v979 = vunpack.c.l.b16 %v190
    %v980 = vunpack.c.h.b16 %v190
    %v981 = vunpack.c.l.b16 %v191
    %v982 = vunpack.c.h.b16 %v191
    %v983 = vunpack.c.l.b16 %v192
    %v984 = vunpack.c.h.b16 %v192
    %v985 = vunpack.c.l.b16 %v193
    %v986 = vunpack.c.h.b16 %v193
    %v987 = vunpack.c.l.b16 %v194
    %v988 = vunpack.c.h.b16 %v194
    %v989 = vunpack.c.l.b16 %v195
    %v990 = vunpack.c.h.b16 %v195
    %v991 = vunpack.c.l.b16 %v196
    %v992 = vunpack.c.h.b16 %v196
    %v993 = vunpack.c.l.b16 %v197
    %v994 = vunpack.c.h.b16 %v197
    %v995 = vunpack.c.l.b16 %v198
    %v996 = vunpack.c.h.b16 %v198
    %v997 = vunpack.c.l.b16 %v199
    %v998 = vunpack.c.h.b16 %v199
    %v999 = vunpack.c.l.b16 %v200
    %v1000 = vunpack.c.h.b16 %v200
    %v1001 = vunpack.c.l.b16 %v201
    %v1002 = vunpack.c.h.b16 %v201
    %v1003 = vunpack.c.l.b16 %v202
    %v1004 = vunpack.c.h.b16 %v202
    %v1005 = vunpack.c.l.b16 %v203
    %v1006 = vunpack.c.h.b16 %v203
    %v1007 = vunpack.c.l.b16 %v204
    %v1008 = vunpack.c.h.b16 %v204
    %v1009 = vunpack.c.l.b16 %v205
    %v1010 = vunpack.c.h.b16 %v205
    %v1011 = vunpack.c.l.b16 %v206
    %v1012 = vunpack.c.h.b16 %v206
    %v1013 = vunpack.c.l.b16 %v207
    %v1014 = vunpack.c.h.b16 %v207
    %v1015 = vunpack.c.l.b16 %v208
    %v1016 = vunpack.c.h.b16 %v208
    %v1017 = vunpack.c.l.b16 %v209
    %v1018 = vunpack.c.h.b16 %v209
    %v1019 = vunpack.c.l.b16 %v210
    %v1020 = vunpack.c.h.b16 %v210
    %v1021 = vunpack.c.l.b16 %v211
    %v1022 = vunpack.c.h.b16 %v211
    %v1023 = vunpack.c.l.b16 %v212
    %v1024 = vunpack.c.h.b16 %v212
    %v1025 = vunpack.c.l.b16 %v213
    %v1026 = vunpack.c.h.b16 %v213
    %v1027 = vunpack.c.l.b16 %v214
    %v1028 = vunpack.c.h.b16 %v214
    %v1029 = vunpack.c.l.b16 %v215
    %v1030 = vunpack.c.h.b16 %v215
    %v1031 = vunpack.c.l.b16 %v216
    %v1032 = vunpack.c.h.b16 %v216
    %v1033 = vunpack.c.l.b16 %v217
    %v1034 = vunpack.c.h.b16 %v217
    %v1035 = vunpack.c.l.b16 %v218
    %v1036 = vunpack.c.h.b16 %v218
    %v1037 = vunpack.c.l.b16 %v219
    %v1038 = vunpack.c.h.b16 %v219
    %v1039 = vunpack.c.l.b16 %v220
    %v1040 = vunpack.c.h.b16 %v220
    %v1041 = vunpack.c.l.b16 %v221
    %v1042 = vunpack.c.h.b16 %v221
    %v1043 = vunpack.c.l.b16 %v222
    %v1044 = vunpack.c.h.b16 %v222
    %v1045 = vunpack.c.l.b16 %v223
    %v1046 = vunpack.c.h.b16 %v223
    %v1047 = vunpack.c.l.b16 %v224
    %v1048 = vunpack.c.h.b16 %v224
    %v1049 = vunpack.c.l.b16 %v225
    %v1050 = vunpack.c.h.b16 %v225
    %v1051 = vunpack.c.l.b16 %v226
    %v1052 = vunpack.c.h.b16 %v226
    %v1053 = vunpack.c.l.b16 %v227
    %v1054 = vunpack.c.h.b16 %v227
    %v1055 = vunpack.c.l.b16 %v228
    %v1056 = vunpack.c.h.b16 %v228
    %v1057 = vunpack.c.l.b16 %v229
    %v1058 = vunpack.c.h.b16 %v229
    %v1059 = vunpack.c.l.b16 %v230
    %v1060 = vunpack.c.h.b16 %v230
    %v1061 = vunpack.c.l.b16 %v231
    %v1062 = vunpack.c.h.b16 %v231
    %v1063 = vunpack.c.l.b16 %v232
    %v1064 = vunpack.c.h.b16 %v232
    %v1065 = vunpack.c.l.b16 %v233
    %v1066 = vunpack.c.h.b16 %v233
    %v1067 = vunpack.c.l.b16 %v234
    %v1068 = vunpack.c.h.b16 %v234
    %v1069 = vunpack.c.l.b16 %v235
    %v1070 = vunpack.c.h.b16 %v235
    %v1071 = vunpack.c.l.b16 %v236
    %v1072 = vunpack.c.h.b16 %v236
    %v1073 = vunpack.c.l.b16 %v237
    %v1074 = vunpack.c.h.b16 %v237
    %v1075 = vunpack.c.l.b16 %v238
    %v1076 = vunpack.c.h.b16 %v238
    %v1077 = vunpack.c.l.b16 %v239
    %v1078 = vunpack.c.h.b16 %v239
    %v1079 = vunpack.c.l.b16 %v240
    %v1080 = vunpack.c.h.b16 %v240
    %v1081 = vunpack.c.l.b16 %v241
    %v1082 = vunpack.c.h.b16 %v241
    %v1083 = vunpack.c.l.b16 %v242
    %v1084 = vunpack.c.h.b16 %v242
    %v1085 = vunpack.c.l.b16 %v243
    %v1086 = vunpack.c.h.b16 %v243
    %v1087 = vunpack.c.l.b16 %v244
    %v1088 = vunpack.c.h.b16 %v244
    %v1089 = vunpack.c.l.b16 %v245
    %v1090 = vunpack.c.h.b16 %v245
    %v1091 = vunpack.c.l.b16 %v246
    %v1092 = vunpack.c.h.b16 %v246
    %v1093 = vunpack.c.l.b16 %v247
    %v1094 = vunpack.c.h.b16 %v247
    %v1095 = vunpack.c.l.b16 %v248
    %v1096 = vunpack.c.h.b16 %v248
    %v1097 = vunpack.c.l.b16 %v249
    %v1098 = vunpack.c.h.b16 %v249
    %v1099 = vunpack.c.l.b16 %v250
    %v1100 = vunpack.c.h.b16 %v250
    %v1101 = vunpack.c.l.b16 %v251
    %v1102 = vunpack.c.h.b16 %v251
    %v1103 = vunpack.c.l.b16 %v252
    %v1104 = vunpack.c.h.b16 %v252
    %v1105 = vunpack.c.l.b16 %v253
    %v1106 = vunpack.c.h.b16 %v253
    %v1107 = vunpack.c.l.b16 %v254
    %v1108 = vunpack.c.h.b16 %v254
    %v1109 = vunpack.c.l.b16 %v255
    %v1110 = vunpack.c.h.b16 %v255
    %v1111 = vunpack.c.l.b16 %v256
    %v1112 = vunpack.c.h.b16 %v256
    %v1113 = vunpack.c.l.b16 %v257
    %v1114 = vunpack.c.h.b16 %v257
    %v1115 = vunpack.c.l.b16 %v258
    %v1116 = vunpack.c.h.b16 %v258
    %v1117 = vunpack.c.l.b16 %v259
    %v1118 = vunpack.c.h.b16 %v259
    %v1119 = vunpack.c.l.b16 %v260
    %v1120 = vunpack.c.h.b16 %v260
    %v1121 = vunpack.c.l.b16 %v261
    %v1122 = vunpack.c.h.b16 %v261
    %v1123 = vunpack.c.l.b16 %v262
    %v1124 = vunpack.c.h.b16 %v262
    %v1125 = vunpack.c.l.b16 %v263
    %v1126 = vunpack.c.h.b16 %v263
    %v1127 = vunpack.c.l.b16 %v264
    %v1128 = vunpack.c.h.b16 %v264
    %v1129 = vunpack.c.l.b16 %v265
    %v1130 = vunpack.c.h.b16 %v265
    %v1131 = vunpack.c.l.b16 %v266
    %v1132 = vunpack.c.h.b16 %v266
    %v1133 = vunpack.c.l.b16 %v267
    %v1134 = vunpack.c.h.b16 %v267
    %v1135 = vunpack.c.l.b16 %v268
    %v1136 = vunpack.c.h.b16 %v268
    %v1137 = vunpack.c.l.b16 %v269
    %v1138 = vunpack.c.h.b16 %v269
    %v1139 = vunpack.c.l.b16 %v270
    %v1140 = vunpack.c.h.b16 %v270
    %v1141 = vunpack.c.l.b16 %v271
    %v1142 = vunpack.c.h.b16 %v271
    %v1143 = vunpack.c.l.b16 %v272
    %v1144 = vunpack.c.h.b16 %v272
    %v1145 = vunpack.c.l.b16 %v273
    %v1146 = vunpack.c.h.b16 %v273
    %v1147 = vunpack.c.l.b16 %v274
    %v1148 = vunpack.c.h.b16 %v274
    %v1149 = vunpack.c.l.b16 %v275
    %v1150 = vunpack.c.h.b16 %v275
    %v1151 = vunpack.c.l.b16 %v276
    %v1152 = vunpack.c.h.b16 %v276
    %v1153 = vunpack.c.l.b16 %v277
    %v1154 = vunpack.c.h.b16 %v277
    %v1155 = vunpack.c.l.b16 %v278
    %v1156 = vunpack.c.h.b16 %v278
    %v1157 = vunpack.c.l.b16 %v279
    %v1158 = vunpack.c.h.b16 %v279
    %v1159 = vunpack.c.l.b16 %v280
    %v1160 = vunpack.c.h.b16 %v280
    %v1161 = vunpack.c.l.b16 %v281
    %v1162 = vunpack.c.h.b16 %v281
    %v1163 = vunpack.c.l.b16 %v282
    %v1164 = vunpack.c.h.b16 %v282
    %v1165 = vunpack.c.l.b16 %v283
    %v1166 = vunpack.c.h.b16 %v283
    %v1167 = vunpack.c.l.b16 %v284
    %v1168 = vunpack.c.h.b16 %v284
    %v1169 = vunpack.c.l.b16 %v285
    %v1170 = vunpack.c.h.b16 %v285
    %v1171 = vunpack.c.l.b16 %v286
    %v1172 = vunpack.c.h.b16 %v286
    %v1173 = vunpack.c.l.b16 %v287
    %v1174 = vunpack.c.h.b16 %v287
    %v1175 = vunpack.c.l.b16 %v288
    %v1176 = vunpack.c.h.b16 %v288
    %v1177 = vunpack.c.l.b16 %v289
    %v1178 = vunpack.c.h.b16 %v289
    %v1179 = vunpack.c.l.b16 %v290
    %v1180 = vunpack.c.h.b16 %v290
    %v1181 = vunpack.c.l.b16 %v291
    %v1182 = vunpack.c.h.b16 %v291
    %v1183 = vunpack.c.l.b16 %v292
    %v1184 = vunpack.c.h.b16 %v292
    %v1185 = vunpack.c.l.b16 %v293
    %v1186 = vunpack.c.h.b16 %v293
    %v1187 = vunpack.c.l.b16 %v294
    %v1188 = vunpack.c.h.b16 %v294
    %v1189 = vunpack.c.l.b16 %v295
    %v1190 = vunpack.c.h.b16 %v295
    %v1191 = vunpack.c.l.b16 %v296
    %v1192 = vunpack.c.h.b16 %v296
    %v1193 = vunpack.c.l.b16 %v297
    %v1194 = vunpack.c.h.b16 %v297
    %v1195 = vunpack.c.l.b16 %v298
    %v1196 = vunpack.c.h.b16 %v298
    %v1197 = vunpack.c.l.b16 %v299
    %v1198 = vunpack.c.h.b16 %v299
    %v1199 = vunpack.c.l.b16 %v300
    %v1200 = vunpack.c.h.b16 %v300
    %v1201 = vunpack.c.l.b16 %v301
    %v1202 = vunpack.c.h.b16 %v301
    %v1203 = vunpack.c.l.b16 %v302
    %v1204 = vunpack.c.h.b16 %v302
    %v1205 = vunpack.c.l.b16 %v303
    %v1206 = vunpack.c.h.b16 %v303
    %v1207 = vunpack.c.l.b16 %v304
    %v1208 = vunpack.c.h.b16 %v304
    %v1209 = vunpack.c.l.b16 %v305
    %v1210 = vunpack.c.h.b16 %v305
    %v1211 = vunpack.c.l.b16 %v306
    %v1212 = vunpack.c.h.b16 %v306
    %v1213 = vunpack.c.l.b16 %v307
    %v1214 = vunpack.c.h.b16 %v307
    %v1215 = vunpack.c.l.b16 %v308
    %v1216 = vunpack.c.h.b16 %v308
    %v1217 = vunpack.c.l.b16 %v309
    %v1218 = vunpack.c.h.b16 %v309
    %v1219 = vunpack.c.l.b16 %v310
    %v1220 = vunpack.c.h.b16 %v310
    %v1221 = vunpack.c.l.b16 %v311
    %v1222 = vunpack.c.h.b16 %v311
    %v1223 = vunpack.c.l.b16 %v312
    %v1224 = vunpack.c.h.b16 %v312
    %v1225 = vunpack.c.l.b16 %v313
    %v1226 = vunpack.c.h.b16 %v313
    %v1227 = vunpack.c.l.b16 %v314
    %v1228 = vunpack.c.h.b16 %v314
    %v1229 = vunpack.c.l.b16 %v315
    %v1230 = vunpack.c.h.b16 %v315
    %v1231 = vunpack.c.l.b16 %v316
    %v1232 = vunpack.c.h.b16 %v316
    %v1233 = vunpack.c.l.b16 %v317
    %v1234 = vunpack.c.h.b16 %v317
    %v1235 = vunpack.c.l.b16 %v318
    %v1236 = vunpack.c.h.b16 %v318
    %v1237 = vunpack.c.l.b16 %v319
    %v1238 = vunpack.c.h.b16 %v319
    %v1239 = vunpack.c.l.b16 %v320
    %v1240 = vunpack.c.h.b16 %v320
    %v1241 = vunpack.c.l.b16 %v321
    %v1242 = vunpack.c.h.b16 %v321
    %v1243 = vunpack.c.l.b16 %v322
    %v1244 = vunpack.c.h.b16 %v322
    %v1245 = vunpack.c.l.b16 %v323
    %v1246 = vunpack.c.h.b16 %v323
    %v1247 = vunpack.c.l.b16 %v324
    %v1248 = vunpack.c.h.b16 %v324
    %v1249 = vunpack.c.l.b16 %v325
    %v1250 = vunpack.c.h.b16 %v325
    %v1251 = vunpack.c.l.b16 %v326
    %v1252 = vunpack.c.h.b16 %v326
    %v1253 = vunpack.c.l.b16 %v327
    %v1254 = vunpack.c.h.b16 %v327
    %v1255 = vunpack.c.l.b16 %v328
    %v1256 = vunpack.c.h.b16 %v328
    %v1257 = vunpack.c.l.b16 %v329
    %v1258 = vunpack.c.h.b16 %v329
    %v1259 = vunpack.c.l.b16 %v330
    %v1260 = vunpack.c.h.b16 %v330
    %v1261 = vunpack.c.l.b16 %v331
    %v1262 = vunpack.c.h.b16 %v331
    %v1263 = vunpack.c.l.b16 %v332
    %v1264 = vunpack.c.h.b16 %v332
    %v1265 = vunpack.c.l.b16 %v333
    %v1266 = vunpack.c.h.b16 %v333
    %v1267 = vunpack.c.l.b16 %v334
    %v1268 = vunpack.c.h.b16 %v334
    %v1269 = vunpack.c.l.b16 %v335
    %v1270 = vunpack.c.h.b16 %v335
    %v1271 = vunpack.c.l.b16 %v336
    %v1272 = vunpack.c.h.b16 %v336
    %v1273 = vunpack.c.l.b16 %v337
    %v1274 = vunpack.c.h.b16 %v337
    %v1275 = vunpack.c.l.b16 %v338
    %v1276 = vunpack.c.h.b16 %v338
    %v1277 = vunpack.c.l.b16 %v339
    %v1278 = vunpack.c.h.b16 %v339
    %v1279 = vunpack.c.l.b16 %v340
    %v1280 = vunpack.c.h.b16 %v340
    %v1281 = vunpack.c.l.b16 %v341
    %v1282 = vunpack.c.h.b16 %v341
    %v1283 = vunpack.c.l.b16 %v342
    %v1284 = vunpack.c.h.b16 %v342
    %v1285 = vunpack.c.l.b16 %v343
    %v1286 = vunpack.c.h.b16 %v343
    %v1287 = vunpack.c.l.b16 %v344
    %v1288 = vunpack.c.h.b16 %v344
    %v1289 = vunpack.c.l.b16 %v345
    %v1290 = vunpack.c.h.b16 %v345
    %v1291 = vunpack.c.l.b16 %v346
    %v1292 = vunpack.c.h.b16 %v346
    %v1293 = vunpack.c.l.b16 %v347
    %v1294 = vunpack.c.h.b16 %v347
    %v1295 = vunpack.c.l.b16 %v348
    %v1296 = vunpack.c.h.b16 %v348
    %v1297 = vunpack.c.l.b16 %v349
    %v1298 = vunpack.c.h.b16 %v349
    %v1299 = vunpack.c.l.b16 %v350
    %v1300 = vunpack.c.h.b16 %v350
    %v1301 = vunpack.c.l.b16 %v351
    %v1302 = vunpack.c.h.b16 %v351
    %v1303 = vunpack.c.l.b16 %v352
    %v1304 = vunpack.c.h.b16 %v352
    %v1305 = vunpack.c.l.b16 %v353
    %v1306 = vunpack.c.h.b16 %v353
    %v1307 = vunpack.c.l.b16 %v354
    %v1308 = vunpack.c.h.b16 %v354
    %v1309 = vunpack.c.l.b16 %v355
    %v1310 = vunpack.c.h.b16 %v355
    %v1311 = vunpack.c.l.b16 %v356
    %v1312 = vunpack.c.h.b16 %v356
    %v1313 = vunpack.c.l.b16 %v357
    %v1314 = vunpack.c.h.b16 %v357
    %v1315 = vunpack.c.l.b16 %v358
    %v1316 = vunpack.c.h.b16 %v358
    %v1317 = vunpack.c.l.b16 %v359
    %v1318 = vunpack.c.h.b16 %v359
    %v1319 = vunpack.c.l.b16 %v360
    %v1320 = vunpack.c.h.b16 %v360
    %v1321 = vunpack.c.l.b16 %v361
    %v1322 = vunpack.c.h.b16 %v361
    %v1323 = vunpack.c.l.b16 %v362
    %v1324 = vunpack.c.h.b16 %v362
    %v1325 = vunpack.c.l.b16 %v363
    %v1326 = vunpack.c.h.b16 %v363
    %v1327 = vunpack.c.l.b16 %v364
    %v1328 = vunpack.c.h.b16 %v364
    %v1329 = vunpack.c.l.b16 %v365
    %v1330 = vunpack.c.h.b16 %v365
    %v1331 = vunpack.c.l.b16 %v366
    %v1332 = vunpack.c.h.b16 %v366
    %v1333 = vunpack.c.l.b16 %v367
    %v1334 = vunpack.c.h.b16 %v367
    %v1335 = vunpack.c.l.b16 %v368
    %v1336 = vunpack.c.h.b16 %v368
    %v1337 = vunpack.c.l.b16 %v369
    %v1338 = vunpack.c.h.b16 %v369
    %v1339 = vunpack.c.l.b16 %v370
    %v1340 = vunpack.c.h.b16 %v370
    %v1341 = vunpack.c.l.b16 %v371
    %v1342 = vunpack.c.h.b16 %v371
    %v1343 = vunpack.c.l.b16 %v372
    %v1344 = vunpack.c.h.b16 %v372
    %v1345 = vunpack.c.l.b16 %v373
    %v1346 = vunpack.c.h.b16 %v373
    %v1347 = vunpack.c.l.b16 %v374
    %v1348 = vunpack.c.h.b16 %v374
    %v1349 = vunpack.c.l.b16 %v375
    %v1350 = vunpack.c.h.b16 %v375
    %v1351 = vunpack.c.l.b16 %v376
    %v1352 = vunpack.c.h.b16 %v376
    %v1353 = vunpack.c.l.b16 %v377
    %v1354 = vunpack.c.h.b16 %v377
    %v1355 = vunpack.c.l.b16 %v378
    %v1356 = vunpack.c.h.b16 %v378
    %v1357 = vunpack.c.l.b16 %v379
    %v1358 = vunpack.c.h.b16 %v379
    %v1359 = vunpack.c.l.b16 %v380
    %v1360 = vunpack.c.h.b16 %v380
    %v1361 = vunpack.c.l.b16 %v381
    %v1362 = vunpack.c.h.b16 %v381
    %v1363 = vunpack.c.l.b16 %v382
    %v1364 = vunpack.c.h.b16 %v382
    %v1365 = vunpack.c.l.b16 %v383
    %v1366 = vunpack.c.h.b16 %v383
    %v1367 = vunpack.c.l.b16 %v384
    %v1368 = vunpack.c.h.b16 %v384
    %v1369 = vunpack.c.l.b16 %v385
    %v1370 = vunpack.c.h.b16 %v385
    %v1371 = vunpack.c.l.b16 %v386
    %v1372 = vunpack.c.h.b16 %v386
    %v1373 = vunpack.c.l.b16 %v387
    %v1374 = vunpack.c.h.b16 %v387
    %v1375 = vunpack.c.l.b16 %v388
    %v1376 = vunpack.c.h.b16 %v388
    %v1377 = vunpack.c.l.b16 %v389
    %v1378 = vunpack.c.h.b16 %v389
    %v1379 = vunpack.c.l.b16 %v390
    %v1380 = vunpack.c.h.b16 %v390
    %v1381 = vunpack.c.l.b16 %v391
    %v1382 = vunpack.c.h.b16 %v391
    %v1383 = vunpack.c.l.b16 %v392
    %v1384 = vunpack.c.h.b16 %v392
    %v1385 = vunpack.c.l.b16 %v393
    %v1386 = vunpack.c.h.b16 %v393
    %v1387 = vunpack.c.l.b16 %v394
    %v1388 = vunpack.c.h.b16 %v394
    %v1389 = vunpack.c.l.b16 %v395
    %v1390 = vunpack.c.h.b16 %v395
    %v1391 = vunpack.c.l.b16 %v396
    %v1392 = vunpack.c.h.b16 %v396
    %v1393 = vunpack.c.l.b16 %v397
    %v1394 = vunpack.c.h.b16 %v397
    %v1395 = vunpack.c.l.b16 %v398
    %v1396 = vunpack.c.h.b16 %v398
    %v1397 = vunpack.c.l.b16 %v399
    %v1398 = vunpack.c.h.b16 %v399
    %v1399 = vunpack.c.l.b16 %v400
    %v1400 = vunpack.c.h.b16 %v400
    %v1401 = vunpack.c.l.b16 %v401
    %v1402 = vunpack.c.h.b16 %v401
    %v1403 = vunpack.c.l.b16 %v402
    %v1404 = vunpack.c.h.b16 %v402
    %v1405 = vunpack.c.l.b16 %v403
    %v1406 = vunpack.c.h.b16 %v403
    %v1407 = vunpack.c.l.b16 %v404
    %v1408 = vunpack.c.h.b16 %v404
    %v1409 = vunpack.c.l.b16 %v405
    %v1410 = vunpack.c.h.b16 %v405
    %v1411 = vunpack.c.l.b16 %v406
    %v1412 = vunpack.c.h.b16 %v406
    %v1413 = vunpack.c.l.b16 %v407
    %v1414 = vunpack.c.h.b16 %v407
    %v1415 = vunpack.c.l.b16 %v408
    %v1416 = vunpack.c.h.b16 %v408
    %v1417 = vunpack.c.l.b16 %v409
    %v1418 = vunpack.c.h.b16 %v409
    %v1419 = vunpack.c.l.b16 %v410
    %v1420 = vunpack.c.h.b16 %v410
    %v1421 = vunpack.c.l.b16 %v411
    %v1422 = vunpack.c.h.b16 %v411
    %v1423 = vunpack.c.l.b16 %v412
    %v1424 = vunpack.c.h.b16 %v412
    %v1425 = vunpack.c.l.b16 %v413
    %v1426 = vunpack.c.h.b16 %v413
    %v1427 = vunpack.c.l.b16 %v414
    %v1428 = vunpack.c.h.b16 %v414
    %v1429 = vunpack.c.l.b16 %v415
    %v1430 = vunpack.c.h.b16 %v415
    %v1431 = vunpack.c.l.b16 %v416
    %v1432 = vunpack.c.h.b16 %v416
    %v1433 = vunpack.c.l.b16 %v417
    %v1434 = vunpack.c.h.b16 %v417
    %v1435 = vunpack.c.l.b16 %v418
    %v1436 = vunpack.c.h.b16 %v418
    %v1437 = vunpack.c.l.b16 %v419
    %v1438 = vunpack.c.h.b16 %v419
    %v1439 = vunpack.c.l.b16 %v420
    %v1440 = vunpack.c.h.b16 %v420
    %v1441 = vunpack.c.l.b16 %v421
    %v1442 = vunpack.c.h.b16 %v421
    %v1443 = vunpack.c.l.b16 %v422
    %v1444 = vunpack.c.h.b16 %v422
    %v1445 = vunpack.c.l.b16 %v423
    %v1446 = vunpack.c.h.b16 %v423
    %v1447 = vunpack.c.l.b16 %v424
    %v1448 = vunpack.c.h.b16 %v424
    %v1449 = vunpack.c.l.b16 %v425
    %v1450 = vunpack.c.h.b16 %v425
    %v1451 = vunpack.c.l.b16 %v426
    %v1452 = vunpack.c.h.b16 %v426
    %v1453 = vunpack.c.l.b16 %v427
    %v1454 = vunpack.c.h.b16 %v427
    %v1455 = vunpack.c.l.b16 %v428
    %v1456 = vunpack.c.h.b16 %v428
    %v1457 = vpack.c.b16 %v825, %v817
    %v1458 = vpack.c.b16 %v826, %v818
    %v1459 = vpack.c.b16 %v827, %v819
    %v1460 = vpack.c.b16 %v828, %v820
    %v1461 = vpack.c.b16 %v829, %v821
    %v1462 = vpack.c.b16 %v830, %v822
    %v1463 = vpack.c.b16 %v831, %v823
    %v1464 = vpack.c.b16 %v832, %v824
    %v1465 = vpack.c.b16 %v841, %v833
    %v1466 = vpack.c.b16 %v842, %v834
    %v1467 = vpack.c.b16 %v843, %v835
    %v1468 = vpack.c.b16 %v844, %v836
    %v1469 = vpack.c.b16 %v845, %v837
    %v1470 = vpack.c.b16 %v846, %v838
    %v1471 = vpack.c.b16 %v847, %v839
    %v1472 = vpack.c.b16 %v848, %v840
    %v1473 = vpack.c.b16 %v857, %v849
    %v1474 = vpack.c.b16 %v858, %v850
    %v1475 = vpack.c.b16 %v859, %v851
    %v1476 = vpack.c.b16 %v860, %v852
    %v1477 = vpack.c.b16 %v861, %v853
    %v1478 = vpack.c.b16 %v862, %v854
    %v1479 = vpack.c.b16 %v863, %v855
    %v1480 = vpack.c.b16 %v864, %v856
    %v1481 = vpack.c.b16 %v873, %v865
    %v1482 = vpack.c.b16 %v874, %v866
    %v1483 = vpack.c.b16 %v875, %v867
    %v1484 = vpack.c.b16 %v876, %v868
    %v1485 = vpack.c.b16 %v877, %v869
    %v1486 = vpack.c.b16 %v878, %v870
    %v1487 = vpack.c.b16 %v879, %v871
    %v1488 = vpack.c.b16 %v880, %v872
    %v1489 = vpack.c.b16 %v889, %v881
    %v1490 = vpack.c.b16 %v890, %v882
    %v1491 = vpack.c.b16 %v891, %v883
    %v1492 = vpack.c.b16 %v892, %v884
    %v1493 = vpack.c.b16 %v893, %v885
    %v1494 = vpack.c.b16 %v894, %v886
    %v1495 = vpack.c.b16 %v895, %v887
    %v1496 = vpack.c.b16 %v896, %v888
    %v1497 = vpack.c.b16 %v905, %v897
    %v1498 = vpack.c.b16 %v906, %v898
    %v1499 = vpack.c.b16 %v907, %v899
    %v1500 = vpack.c.b16 %v908, %v900
    %v1501 = vpack.c.b16 %v909, %v901
    %v1502 = vpack.c.b16 %v910, %v902
    %v1503 = vpack.c.b16 %v911, %v903
    %v1504 = vpack.c.b16 %v912, %v904
    %v1505 = vpack.c.b16 %v921, %v913
    %v1506 = vpack.c.b16 %v922, %v914
    %v1507 = vpack.c.b16 %v923, %v915
    %v1508 = vpack.c.b16 %v924, %v916
    %v1509 = vpack.c.b16 %v925, %v917
    %v1510 = vpack.c.b16 %v926, %v918
    %v1511 = vpack.c.b16 %v927, %v919
    %v1512 = vpack.c.b16 %v928, %v920
    %v1513 = vpack.c.b16 %v937, %v929
    %v1514 = vpack.c.b16 %v938, %v930
    %v1515 = vpack.c.b16 %v939, %v931
    %v1516 = vpack.c.b16 %v940, %v932
    %v1517 = vpack.c.b16 %v941, %v933
    %v1518 = vpack.c.b16 %v942, %v934
    %v1519 = vpack.c.b16 %v943, %v935
    %v1520 = vpack.c.b16 %v944, %v936
    %v1521 = vpack.c.b16 %v953, %v945
    %v1522 = vpack.c.b16 %v954, %v946
    %v1523 = vpack.c.b16 %v955, %v947
    %v1524 = vpack.c.b16 %v956, %v948
    %v1525 = vpack.c.b16 %v957, %v949
    %v1526 = vpack.c.b16 %v958, %v950
    %v1527 = vpack.c.b16 %v959, %v951
    %v1528 = vpack.c.b16 %v960, %v952
    %v1529 = vpack.c.b16 %v969, %v961
    %v1530 = vpack.c.b16 %v970, %v962
    %v1531 = vpack.c.b16 %v971, %v963
    %v1532 = vpack.c.b16 %v972, %v964
    %v1533 = vpack.c.b16 %v973, %v965
    %v1534 = vpack.c.b16 %v974, %v966
    %v1535 = vpack.c.b16 %v975, %v967
    %v1536 = vpack.c.b16 %v976, %v968
    %v1537 = vpack.c.b16 %v985, %v977
    %v1538 = vpack.c.b16 %v986, %v978
    %v1539 = vpack.c.b16 %v987, %v979
    %v1540 = vpack.c.b16 %v988, %v980
    %v1541 = vpack.c.b16 %v989, %v981
    %v1542 = vpack.c.b16 %v990, %v982
    %v1543 = vpack.c.b16 %v991, %v983
    %v1544 = vpack.c.b16 %v992, %v984
    %v1545 = vpack.c.b16 %v1001, %v993
    %v1546 = vpack.c.b16 %v1002, %v994
    %v1547 = vpack.c.b16 %v1003, %v995
    %v1548 = vpack.c.b16 %v1004, %v996
    %v1549 = vpack.c.b16 %v1005, %v997
    %v1550 = vpack.c.b16 %v1006, %v998
    %v1551 = vpack.c.b16 %v1007, %v999
    %v1552 = vpack.c.b16 %v1008, %v1000
    %v1553 = vpack.c.b16 %v1017, %v1009
    %v1554 = vpack.c.b16 %v1018, %v1010
    %v1555 = vpack.c.b16 %v1019, %v1011
    %v1556 = vpack.c.b16 %v1020, %v1012
    %v1557 = vpack.c.b16 %v1021, %v1013
    %v1558 = vpack.c.b16 %v1022, %v1014
    %v1559 = vpack.c.b16 %v1023, %v1015
    %v1560 = vpack.c.b16 %v1024, %v1016
    %v1561 = vpack.c.b16 %v1033, %v1025
    %v1562 = vpack.c.b16 %v1034, %v1026
    %v1563 = vpack.c.b16 %v1035, %v1027
    %v1564 = vpack.c.b16 %v1036, %v1028
    %v1565 = vpack.c.b16 %v1037, %v1029
    %v1566 = vpack.c.b16 %v1038, %v1030
    %v1567 = vpack.c.b16 %v1039, %v1031
    %v1568 = vpack.c.b16 %v1040, %v1032
    %v1569 = vpack.c.b16 %v1049, %v1041
    %v1570 = vpack.c.b16 %v1050, %v1042
    %v1571 = vpack.c.b16 %v1051, %v1043
    %v1572 = vpack.c.b16 %v1052, %v1044
    %v1573 = vpack.c.b16 %v1053, %v1045
    %v1574 = vpack.c.b16 %v1054, %v1046
    %v1575 = vpack.c.b16 %v1055, %v1047
    %v1576 = vpack.c.b16 %v1056, %v1048
    %v1577 = vpack.c.b16 %v1065, %v1057
    %v1578 = vpack.c.b16 %v1066, %v1058
    %v1579 = vpack.c.b16 %v1067, %v1059
    %v1580 = vpack.c.b16 %v1068, %v1060
    %v1581 = vpack.c.b16 %v1069, %v1061
    %v1582 = vpack.c.b16 %v1070, %v1062
    %v1583 = vpack.c.b16 %v1071, %v1063
    %v1584 = vpack.c.b16 %v1072, %v1064
    %v1585 = vpack.c.b16 %v1081, %v1073
    %v1586 = vpack.c.b16 %v1082, %v1074
    %v1587 = vpack.c.b16 %v1083, %v1075
    %v1588 = vpack.c.b16 %v1084, %v1076
    %v1589 = vpack.c.b16 %v1085, %v1077
    %v1590 = vpack.c.b16 %v1086, %v1078
    %v1591 = vpack.c.b16 %v1087, %v1079
    %v1592 = vpack.c.b16 %v1088, %v1080
    %v1593 = vpack.c.b16 %v1097, %v1089
    %v1594 = vpack.c.b16 %v1098, %v1090
    %v1595 = vpack.c.b16 %v1099, %v1091
    %v1596 = vpack.c.b16 %v1100, %v1092
    %v1597 = vpack.c.b16 %v1101, %v1093
    %v1598 = vpack.c.b16 %v1102, %v1094
    %v1599 = vpack.c.b16 %v1103, %v1095
    %v1600 = vpack.c.b16 %v1104, %v1096
    %v1601 = vpack.c.b16 %v1113, %v1105
    %v1602 = vpack.c.b16 %v1114, %v1106
    %v1603 = vpack.c.b16 %v1115, %v1107
    %v1604 = vpack.c.b16 %v1116, %v1108
    %v1605 = vpack.c.b16 %v1117, %v1109
    %v1606 = vpack.c.b16 %v1118, %v1110
    %v1607 = vpack.c.b16 %v1119, %v1111
    %v1608 = vpack.c.b16 %v1120, %v1112
    %v1609 = vpack.c.b16 %v1129, %v1121
    %v1610 = vpack.c.b16 %v1130, %v1122
    %v1611 = vpack.c.b16 %v1131, %v1123
    %v1612 = vpack.c.b16 %v1132, %v1124
    %v1613 = vpack.c.b16 %v1133, %v1125
    %v1614 = vpack.c.b16 %v1134, %v1126
    %v1615 = vpack.c.b16 %v1135, %v1127
    %v1616 = vpack.c.b16 %v1136, %v1128
    %v1617 = vpack.c.b16 %v1145, %v1137
    %v1618 = vpack.c.b16 %v1146, %v1138
    %v1619 = vpack.c.b16 %v1147, %v1139
    %v1620 = vpack.c.b16 %v1148, %v1140
    %v1621 = vpack.c.b16 %v1149, %v1141
    %v1622 = vpack.c.b16 %v1150, %v1142
    %v1623 = vpack.c.b16 %v1151, %v1143
    %v1624 = vpack.c.b16 %v1152, %v1144
    %v1625 = vpack.c.b16 %v1161, %v1153
    %v1626 = vpack.c.b16 %v1162, %v1154
    %v1627 = vpack.c.b16 %v1163, %v1155
    %v1628 = vpack.c.b16 %v1164, %v1156
    %v1629 = vpack.c.b16 %v1165, %v1157
    %v1630 = vpack.c.b16 %v1166, %v1158
    %v1631 = vpack.c.b16 %v1167, %v1159
    %v1632 = vpack.c.b16 %v1168, %v1160
    %v1633 = vpack.c.b16 %v1177, %v1169
    %v1634 = vpack.c.b16 %v1178, %v1170
    %v1635 = vpack.c.b16 %v1179, %v1171
    %v1636 = vpack.c.b16 %v1180, %v1172
    %v1637 = vpack.c.b16 %v1181, %v1173
    %v1638 = vpack.c.b16 %v1182, %v1174
    %v1639 = vpack.c.b16 %v1183, %v1175
    %v1640 = vpack.c.b16 %v1184, %v1176
    %v1641 = vpack.c.b16 %v1193, %v1185
    %v1642 = vpack.c.b16 %v1194, %v1186
    %v1643 = vpack.c.b16 %v1195, %v1187
    %v1644 = vpack.c.b16 %v1196, %v1188
    %v1645 = vpack.c.b16 %v1197, %v1189
    %v1646 = vpack.c.b16 %v1198, %v1190
    %v1647 = vpack.c.b16 %v1199, %v1191
    %v1648 = vpack.c.b16 %v1200, %v1192
    %v1649 = vpack.c.b16 %v1209, %v1201
    %v1650 = vpack.c.b16 %v1210, %v1202
    %v1651 = vpack.c.b16 %v1211, %v1203
    %v1652 = vpack.c.b16 %v1212, %v1204
    %v1653 = vpack.c.b16 %v1213, %v1205
    %v1654 = vpack.c.b16 %v1214, %v1206
    %v1655 = vpack.c.b16 %v1215, %v1207
    %v1656 = vpack.c.b16 %v1216, %v1208
    %v1657 = vpack.c.b16 %v1225, %v1217
    %v1658 = vpack.c.b16 %v1226, %v1218
    %v1659 = vpack.c.b16 %v1227, %v1219
    %v1660 = vpack.c.b16 %v1228, %v1220
    %v1661 = vpack.c.b16 %v1229, %v1221
    %v1662 = vpack.c.b16 %v1230, %v1222
    %v1663 = vpack.c.b16 %v1231, %v1223
    %v1664 = vpack.c.b16 %v1232, %v1224
    %v1665 = vpack.c.b16 %v1241, %v1233
    %v1666 = vpack.c.b16 %v1242, %v1234
    %v1667 = vpack.c.b16 %v1243, %v1235
    %v1668 = vpack.c.b16 %v1244, %v1236
    %v1669 = vpack.c.b16 %v1245, %v1237
    %v1670 = vpack.c.b16 %v1246, %v1238
    %v1671 = vpack.c.b16 %v1247, %v1239
    %v1672 = vpack.c.b16 %v1248, %v1240
    %v1673 = vpack.c.b16 %v1257, %v1249
    %v1674 = vpack.c.b16 %v1258, %v1250
    %v1675 = vpack.c.b16 %v1259, %v1251
    %v1676 = vpack.c.b16 %v1260, %v1252
    %v1677 = vpack.c.b16 %v1261, %v1253
    %v1678 = vpack.c.b16 %v1262, %v1254
    %v1679 = vpack.c.b16 %v1263, %v1255
    %v1680 = vpack.c.b16 %v1264, %v1256
    %v1681 = vpack.c.b16 %v1273, %v1265
    %v1682 = vpack.c.b16 %v1274, %v1266
    %v1683 = vpack.c.b16 %v1275, %v1267
    %v1684 = vpack.c.b16 %v1276, %v1268
    %v1685 = vpack.c.b16 %v1277, %v1269
    %v1686 = vpack.c.b16 %v1278, %v1270
    %v1687 = vpack.c.b16 %v1279, %v1271
    %v1688 = vpack.c.b16 %v1280, %v1272
    %v1689 = vpack.c.b16 %v1289, %v1281
    %v1690 = vpack.c.b16 %v1290, %v1282
    %v1691 = vpack.c.b16 %v1291, %v1283
    %v1692 = vpack.c.b16 %v1292, %v1284
    %v1693 = vpack.c.b16 %v1293, %v1285
    %v1694 = vpack.c.b16 %v1294, %v1286
    %v1695 = vpack.c.b16 %v1295, %v1287
    %v1696 = vpack.c.b16 %v1296, %v1288
    %v1697 = vpack.c.b16 %v1305, %v1297
    %v1698 = vpack.c.b16 %v1306, %v1298
    %v1699 = vpack.c.b16 %v1307, %v1299
    %v1700 = vpack.c.b16 %v1308, %v1300
    %v1701 = vpack.c.b16 %v1309, %v1301
    %v1702 = vpack.c.b16 %v1310, %v1302
    %v1703 = vpack.c.b16 %v1311, %v1303
    %v1704 = vpack.c.b16 %v1312, %v1304
    %v1705 = vpack.c.b16 %v1321, %v1313
    %v1706 = vpack.c.b16 %v1322, %v1314
    %v1707 = vpack.c.b16 %v1323, %v1315
    %v1708 = vpack.c.b16 %v1324, %v1316
    %v1709 = vpack.c.b16 %v1325, %v1317
    %v1710 = vpack.c.b16 %v1326, %v1318
    %v1711 = vpack.c.b16 %v1327, %v1319
    %v1712 = vpack.c.b16 %v1328, %v1320
    %v1713 = vpack.c.b16 %v1337, %v1329
    %v1714 = vpack.c.b16 %v1338, %v1330
    %v1715 = vpack.c.b16 %v1339, %v1331
    %v1716 = vpack.c.b16 %v1340, %v1332
    %v1717 = vpack.c.b16 %v1341, %v1333
    %v1718 = vpack.c.b16 %v1342, %v1334
    %v1719 = vpack.c.b16 %v1343, %v1335
    %v1720 = vpack.c.b16 %v1344, %v1336
    %v1721 = vpack.c.b16 %v1353, %v1345
    %v1722 = vpack.c.b16 %v1354, %v1346
    %v1723 = vpack.c.b16 %v1355, %v1347
    %v1724 = vpack.c.b16 %v1356, %v1348
    %v1725 = vpack.c.b16 %v1357, %v1349
    %v1726 = vpack.c.b16 %v1358, %v1350
    %v1727 = vpack.c.b16 %v1359, %v1351
    %v1728 = vpack.c.b16 %v1360, %v1352
    %v1729 = vpack.c.b16 %v1369, %v1361
    %v1730 = vpack.c.b16 %v1370, %v1362
    %v1731 = vpack.c.b16 %v1371, %v1363
    %v1732 = vpack.c.b16 %v1372, %v1364
    %v1733 = vpack.c.b16 %v1373, %v1365
    %v1734 = vpack.c.b16 %v1374, %v1366
    %v1735 = vpack.c.b16 %v1375, %v1367
    %v1736 = vpack.c.b16 %v1376, %v1368
    %v1737 = vpack.c.b16 %v1385, %v1377
    %v1738 = vpack.c.b16 %v1386, %v1378
    %v1739 = vpack.c.b16 %v1387, %v1379
    %v1740 = vpack.c.b16 %v1388, %v1380
    %v1741 = vpack.c.b16 %v1389, %v1381
    %v1742 = vpack.c.b16 %v1390, %v1382
    %v1743 = vpack.c.b16 %v1391, %v1383
    %v1744 = vpack.c.b16 %v1392, %v1384
    %v1745 = vpack.c.b16 %v1401, %v1393
    %v1746 = vpack.c.b16 %v1402, %v1394
    %v1747 = vpack.c.b16 %v1403, %v1395
    %v1748 = vpack.c.b16 %v1404, %v1396
    %v1749 = vpack.c.b16 %v1405, %v1397
    %v1750 = vpack.c.b16 %v1406, %v1398
    %v1751 = vpack.c.b16 %v1407, %v1399
    %v1752 = vpack.c.b16 %v1408, %v1400
    %v1753 = vpack.c.b16 %v1417, %v1409
    %v1754 = vpack.c.b16 %v1418, %v1410
    %v1755 = vpack.c.b16 %v1419, %v1411
    %v1756 = vpack.c.b16 %v1420, %v1412
    %v1757 = vpack.c.b16 %v1421, %v1413
    %v1758 = vpack.c.b16 %v1422, %v1414
    %v1759 = vpack.c.b16 %v1423, %v1415
    %v1760 = vpack.c.b16 %v1424, %v1416
    %v1761 = vpack.c.b16 %v1433, %v1425
    %v1762 = vpack.c.b16 %v1434, %v1426
    %v1763 = vpack.c.b16 %v1435, %v1427
    %v1764 = vpack.c.b16 %v1436, %v1428
    %v1765 = vpack.c.b16 %v1437, %v1429
    %v1766 = vpack.c.b16 %v1438, %v1430
    %v1767 = vpack.c.b16 %v1439, %v1431
    %v1768 = vpack.c.b16 %v1440, %v1432
    %v1769 = vpack.c.b16 %v1449, %v1441
    %v1770 = vpack.c.b16 %v1450, %v1442
    %v1771 = vpack.c.b16 %v1451, %v1443
    %v1772 = vpack.c.b16 %v1452, %v1444
    %v1773 = vpack.c.b16 %v1453, %v1445
    %v1774 = vpack.c.b16 %v1454, %v1446
    %v1775 = vpack.c.b16 %v1455, %v1447
    %v1776 = vpack.c.b16 %v1456, %v1448
    %2097 = vmatprep.subr.bf16.mxu0 %v1458
    %2098 = vmatpush1.bf16.msra.mxu0 %v1457
    %2099 = vmatprep.subr.bf16.mxu0 %v1466
    %2100 = vmatpush1.bf16.msra.mxu0 %v1465
    %2101 = vmatprep.subr.bf16.mxu0 %v1474
    %2102 = vmatpush1.bf16.msra.mxu0 %v1473
    %2103 = vmatprep.subr.bf16.mxu0 %v1482
    %2104 = vmatpush1.bf16.msra.mxu0 %v1481
    %2105 = vmatprep.subr.bf16.mxu0 %v1490
    %2106 = vmatpush1.bf16.msra.mxu0 %v1489
    %2107 = vmatprep.subr.bf16.mxu0 %v1498
    %2108 = vmatpush1.bf16.msra.mxu0 %v1497
    %2109 = vmatprep.subr.bf16.mxu0 %v1506
    %2110 = vmatpush1.bf16.msra.mxu0 %v1505
    %2111 = vmatprep.subr.bf16.mxu0 %v1514
    %2112 = vmatpush1.bf16.msra.mxu0 %v1513
    %2113 = vmatprep.subr.bf16.mxu0 %v1522
    %2114 = vmatpush1.bf16.msra.mxu0 %v1521
    %2115 = vmatprep.subr.bf16.mxu0 %v1530
    %2116 = vmatpush1.bf16.msra.mxu0 %v1529
    %2117 = vmatprep.subr.bf16.mxu0 %v1538
    %2118 = vmatpush1.bf16.msra.mxu0 %v1537
    %2119 = vmatprep.subr.bf16.mxu0 %v1546
    %2120 = vmatpush1.bf16.msra.mxu0 %v1545
    %2121 = vmatprep.subr.bf16.mxu0 %v1554
    %2122 = vmatpush1.bf16.msra.mxu0 %v1553
    %2123 = vmatprep.subr.bf16.mxu0 %v1562
    %2124 = vmatpush1.bf16.msra.mxu0 %v1561
    %2125 = vmatprep.subr.bf16.mxu0 %v1570
    %2126 = vmatpush1.bf16.msra.mxu0 %v1569
    %2127 = vmatprep.subr.bf16.mxu0 %v1578
    %2128 = vmatpush1.bf16.msra.mxu0 %v1577
    %2129 = vmatprep.mubr.bf16.mxu0 %v488
    %2130 = vmatmul.mubr.bf16.gmra.mrb[0].mxu0 %v487
    %v2131 = vpop.f32.mrb[0].mxu0
    %v2132 = vadd.f32 %v434, %v2131
    %v2133 = vpop.f32.mrb[0].mxu0
    %v2134 = vadd.f32 %v438, %v2133
    %v2135 = vpop.f32.mrb[0].mxu0
    %v2136 = vadd.f32 %v434, %v2135
    %v2137 = vpop.f32.mrb[0].mxu0
    %v2138 = vadd.f32 %v438, %v2137
    %2139 = vdwg.mxu0
    %2140 = vmatprep.subr.bf16.mxu0 %v1586
    %2141 = vmatpush1.bf16.msra.mxu0 %v1585
    %2142 = vmatprep.subr.bf16.mxu0 %v1594
    %2143 = vmatpush1.bf16.msra.mxu0 %v1593
    %2144 = vmatprep.subr.bf16.mxu0 %v1602
    %2145 = vmatpush1.bf16.msra.mxu0 %v1601
    %2146 = vmatprep.subr.bf16.mxu0 %v1610
    %2147 = vmatpush1.bf16.msra.mxu0 %v1609
    %2148 = vmatprep.subr.bf16.mxu0 %v1618
    %2149 = vmatpush1.bf16.msra.mxu0 %v1617
    %2150 = vmatprep.subr.bf16.mxu0 %v1626
    %2151 = vmatpush1.bf16.msra.mxu0 %v1625
    %2152 = vmatprep.subr.bf16.mxu0 %v1634
    %2153 = vmatpush1.bf16.msra.mxu0 %v1633
    %2154 = vmatprep.subr.bf16.mxu0 %v1642
    %2155 = vmatpush1.bf16.msra.mxu0 %v1641
    %2156 = vmatprep.subr.bf16.mxu0 %v1650
    %2157 = vmatpush1.bf16.msra.mxu0 %v1649
    %2158 = vmatprep.subr.bf16.mxu0 %v1658
    %2159 = vmatpush1.bf16.msra.mxu0 %v1657
    %2160 = vmatprep.subr.bf16.mxu0 %v1666
    %2161 = vmatpush1.bf16.msra.mxu0 %v1665
    %2162 = vmatprep.subr.bf16.mxu0 %v1674
    %2163 = vmatpush1.bf16.msra.mxu0 %v1673
    %2164 = vmatprep.subr.bf16.mxu0 %v1682
    %2165 = vmatpush1.bf16.msra.mxu0 %v1681
    %2166 = vmatprep.subr.bf16.mxu0 %v1690
    %2167 = vmatpush1.bf16.msra.mxu0 %v1689
    %2168 = vmatprep.subr.bf16.mxu0 %v1698
    %2169 = vmatpush1.bf16.msra.mxu0 %v1697
    %2170 = vmatprep.subr.bf16.mxu0 %v1706
    %2171 = vmatpush1.bf16.msra.mxu0 %v1705
    %2172 = vmatprep.mubr.bf16.mxu0 %v490
    %2173 = vmatmul.mubr.bf16.gmra.mrb[0].mxu0 %v489
    %v2174 = vpop.f32.mrb[0].mxu0
    %v2175 = vadd.f32 %v2132, %v2174
    %v2176 = vpop.f32.mrb[0].mxu0
    %v2177 = vadd.f32 %v2134, %v2176
    %v2178 = vpop.f32.mrb[0].mxu0
    %v2179 = vadd.f32 %v2136, %v2178
    %v2180 = vpop.f32.mrb[0].mxu0
    %v2181 = vadd.f32 %v2138, %v2180
    %2182 = vdwg.mxu0
    %2183 = vmatprep.subr.bf16.mxu0 %v1714
    %2184 = vmatpush1.bf16.msra.mxu0 %v1713
    %2185 = vmatprep.subr.bf16.mxu0 %v1722
    %2186 = vmatpush1.bf16.msra.mxu0 %v1721
    %2187 = vmatprep.subr.bf16.mxu0 %v1730
    %2188 = vmatpush1.bf16.msra.mxu0 %v1729
    %2189 = vmatprep.subr.bf16.mxu0 %v1738
    %2190 = vmatpush1.bf16.msra.mxu0 %v1737
    %2191 = vmatprep.subr.bf16.mxu0 %v1746
    %2192 = vmatpush1.bf16.msra.mxu0 %v1745
    %2193 = vmatprep.subr.bf16.mxu0 %v1754
    %2194 = vmatpush1.bf16.msra.mxu0 %v1753
    %2195 = vmatprep.subr.bf16.mxu0 %v1762
    %2196 = vmatpush1.bf16.msra.mxu0 %v1761
    %2197 = vmatprep.subr.bf16.mxu0 %v1770
    %2198 = vmatpush1.bf16.msra.mxu0 %v1769
    %2199 = vmatprep.subr.bf16.mxu0 0
    %2200 = vmatpush1.bf16.msra.mxu0 0
    %2201 = vmatprep.subr.bf16.mxu0 0
    %2202 = vmatpush1.bf16.msra.mxu0 0
    %2203 = vmatprep.subr.bf16.mxu0 0
    %2204 = vmatpush1.bf16.msra.mxu0 0
    %2205 = vmatprep.subr.bf16.mxu0 0
    %2206 = vmatpush1.bf16.msra.mxu0 0
    %2207 = vmatprep.subr.bf16.mxu0 0
    %2208 = vmatpush1.bf16.msra.mxu0 0
    %2209 = vmatprep.subr.bf16.mxu0 0
    %2210 = vmatpush1.bf16.msra.mxu0 0
    %2211 = vmatprep.subr.bf16.mxu0 0
    %2212 = vmatpush1.bf16.msra.mxu0 0
    %2213 = vmatprep.subr.bf16.mxu0 0
    %2214 = vmatpush1.bf16.msra.mxu0 0
    %2215 = vmatprep.mubr.bf16.mxu0 0
    %2216 = vmatmul.mubr.bf16.gmra.mrb[0].mxu0 %v491
    %v2217 = vpop.f32.mrb[0].mxu0
    %v2218 = vadd.f32 %v2175, %v2217
    %v2219 = vpop.f32.mrb[0].mxu0
    %v2220 = vadd.f32 %v2177, %v2219
    %v2221 = vpop.f32.mrb[0].mxu0
    %v2222 = vadd.f32 %v2179, %v2221
    %v2223 = vpop.f32.mrb[0].mxu0
    %v2224 = vadd.f32 %v2181, %v2223
    %2225 = vdwg.mxu0
    %2226 = vmatprep.subr.bf16.mxu0 %v1460
    %2227 = vmatpush1.bf16.msra.mxu0 %v1459
    %2228 = vmatprep.subr.bf16.mxu0 %v1468
    %2229 = vmatpush1.bf16.msra.mxu0 %v1467
    %2230 = vmatprep.subr.bf16.mxu0 %v1476
    %2231 = vmatpush1.bf16.msra.mxu0 %v1475
    %2232 = vmatprep.subr.bf16.mxu0 %v1484
    %2233 = vmatpush1.bf16.msra.mxu0 %v1483
    %2234 = vmatprep.subr.bf16.mxu0 %v1492
    %2235 = vmatpush1.bf16.msra.mxu0 %v1491
    %2236 = vmatprep.subr.bf16.mxu0 %v1500
    %2237 = vmatpush1.bf16.msra.mxu0 %v1499
    %2238 = vmatprep.subr.bf16.mxu0 %v1508
    %2239 = vmatpush1.bf16.msra.mxu0 %v1507
    %2240 = vmatprep.subr.bf16.mxu0 %v1516
    %2241 = vmatpush1.bf16.msra.mxu0 %v1515
    %2242 = vmatprep.subr.bf16.mxu0 %v1524
    %2243 = vmatpush1.bf16.msra.mxu0 %v1523
    %2244 = vmatprep.subr.bf16.mxu0 %v1532
    %2245 = vmatpush1.bf16.msra.mxu0 %v1531
    %2246 = vmatprep.subr.bf16.mxu0 %v1540
    %2247 = vmatpush1.bf16.msra.mxu0 %v1539
    %2248 = vmatprep.subr.bf16.mxu0 %v1548
    %2249 = vmatpush1.bf16.msra.mxu0 %v1547
    %2250 = vmatprep.subr.bf16.mxu0 %v1556
    %2251 = vmatpush1.bf16.msra.mxu0 %v1555
    %2252 = vmatprep.subr.bf16.mxu0 %v1564
    %2253 = vmatpush1.bf16.msra.mxu0 %v1563
    %2254 = vmatprep.subr.bf16.mxu0 %v1572
    %2255 = vmatpush1.bf16.msra.mxu0 %v1571
    %2256 = vmatprep.subr.bf16.mxu0 %v1580
    %2257 = vmatpush1.bf16.msra.mxu0 %v1579
    %2258 = vmatprep.mubr.bf16.mxu0 %v488
    %2259 = vmatmul.mubr.bf16.gmra.mrb[0].mxu0 %v487
    %v2260 = vpop.f32.mrb[0].mxu0
    %v2261 = vadd.f32 %v442, %v2260
    %v2262 = vpop.f32.mrb[0].mxu0
    %v2263 = vadd.f32 %v446, %v2262
    %v2264 = vpop.f32.mrb[0].mxu0
    %v2265 = vadd.f32 %v442, %v2264
    %v2266 = vpop.f32.mrb[0].mxu0
    %v2267 = vadd.f32 %v446, %v2266
    %2268 = vdwg.mxu0
    %2269 = vmatprep.subr.bf16.mxu0 %v1588
    %2270 = vmatpush1.bf16.msra.mxu0 %v1587
    %2271 = vmatprep.subr.bf16.mxu0 %v1596
    %2272 = vmatpush1.bf16.msra.mxu0 %v1595
    %2273 = vmatprep.subr.bf16.mxu0 %v1604
    %2274 = vmatpush1.bf16.msra.mxu0 %v1603
    %2275 = vmatprep.subr.bf16.mxu0 %v1612
    %2276 = vmatpush1.bf16.msra.mxu0 %v1611
    %2277 = vmatprep.subr.bf16.mxu0 %v1620
    %2278 = vmatpush1.bf16.msra.mxu0 %v1619
    %2279 = vmatprep.subr.bf16.mxu0 %v1628
    %2280 = vmatpush1.bf16.msra.mxu0 %v1627
    %2281 = vmatprep.subr.bf16.mxu0 %v1636
    %2282 = vmatpush1.bf16.msra.mxu0 %v1635
    %2283 = vmatprep.subr.bf16.mxu0 %v1644
    %2284 = vmatpush1.bf16.msra.mxu0 %v1643
    %2285 = vmatprep.subr.bf16.mxu0 %v1652
    %2286 = vmatpush1.bf16.msra.mxu0 %v1651
    %2287 = vmatprep.subr.bf16.mxu0 %v1660
    %2288 = vmatpush1.bf16.msra.mxu0 %v1659
    %2289 = vmatprep.subr.bf16.mxu0 %v1668
    %2290 = vmatpush1.bf16.msra.mxu0 %v1667
    %2291 = vmatprep.subr.bf16.mxu0 %v1676
    %2292 = vmatpush1.bf16.msra.mxu0 %v1675
    %2293 = vmatprep.subr.bf16.mxu0 %v1684
    %2294 = vmatpush1.bf16.msra.mxu0 %v1683
    %2295 = vmatprep.subr.bf16.mxu0 %v1692
    %2296 = vmatpush1.bf16.msra.mxu0 %v1691
    %2297 = vmatprep.subr.bf16.mxu0 %v1700
    %2298 = vmatpush1.bf16.msra.mxu0 %v1699
    %2299 = vmatprep.subr.bf16.mxu0 %v1708
    %2300 = vmatpush1.bf16.msra.mxu0 %v1707
    %2301 = vmatprep.mubr.bf16.mxu0 %v490
    %2302 = vmatmul.mubr.bf16.gmra.mrb[0].mxu0 %v489
    %v2303 = vpop.f32.mrb[0].mxu0
    %v2304 = vadd.f32 %v2261, %v2303
    %v2305 = vpop.f32.mrb[0].mxu0
    %v2306 = vadd.f32 %v2263, %v2305
    %v2307 = vpop.f32.mrb[0].mxu0
    %v2308 = vadd.f32 %v2265, %v2307
    %v2309 = vpop.f32.mrb[0].mxu0
    %v2310 = vadd.f32 %v2267, %v2309
    %2311 = vdwg.mxu0
    %2312 = vmatprep.subr.bf16.mxu0 %v1716
    %2313 = vmatpush1.bf16.msra.mxu0 %v1715
    %2314 = vmatprep.subr.bf16.mxu0 %v1724
    %2315 = vmatpush1.bf16.msra.mxu0 %v1723
    %2316 = vmatprep.subr.bf16.mxu0 %v1732
    %2317 = vmatpush1.bf16.msra.mxu0 %v1731
    %2318 = vmatprep.subr.bf16.mxu0 %v1740
    %2319 = vmatpush1.bf16.msra.mxu0 %v1739
    %2320 = vmatprep.subr.bf16.mxu0 %v1748
    %2321 = vmatpush1.bf16.msra.mxu0 %v1747
    %2322 = vmatprep.subr.bf16.mxu0 %v1756
    %2323 = vmatpush1.bf16.msra.mxu0 %v1755
    %2324 = vmatprep.subr.bf16.mxu0 %v1764
    %2325 = vmatpush1.bf16.msra.mxu0 %v1763
    %2326 = vmatprep.subr.bf16.mxu0 %v1772
    %2327 = vmatpush1.bf16.msra.mxu0 %v1771
    %2328 = vmatprep.subr.bf16.mxu0 0
    %2329 = vmatpush1.bf16.msra.mxu0 0
    %2330 = vmatprep.subr.bf16.mxu0 0
    %2331 = vmatpush1.bf16.msra.mxu0 0
    %2332 = vmatprep.subr.bf16.mxu0 0
    %2333 = vmatpush1.bf16.msra.mxu0 0
    %2334 = vmatprep.subr.bf16.mxu0 0
    %2335 = vmatpush1.bf16.msra.mxu0 0
    %2336 = vmatprep.subr.bf16.mxu0 0
    %2337 = vmatpush1.bf16.msra.mxu0 0
    %2338 = vmatprep.subr.bf16.mxu0 0
    %2339 = vmatpush1.bf16.msra.mxu0 0
    %2340 = vmatprep.subr.bf16.mxu0 0
    %2341 = vmatpush1.bf16.msra.mxu0 0
    %2342 = vmatprep.subr.bf16.mxu0 0
    %2343 = vmatpush1.bf16.msra.mxu0 0
    %2344 = vmatprep.mubr.bf16.mxu0 0
    %2345 = vmatmul.mubr.bf16.gmra.mrb[0].mxu0 %v491
    %v2346 = vpop.f32.mrb[0].mxu0
    %v2347 = vadd.f32 %v2304, %v2346
    %v2348 = vpop.f32.mrb[0].mxu0
    %v2349 = vadd.f32 %v2306, %v2348
    %v2350 = vpop.f32.mrb[0].mxu0
    %v2351 = vadd.f32 %v2308, %v2350
    %v2352 = vpop.f32.mrb[0].mxu0
    %v2353 = vadd.f32 %v2310, %v2352
    %2354 = vdwg.mxu0
    %2355 = vmatprep.subr.bf16.mxu0 %v1462
    %2356 = vmatpush1.bf16.msra.mxu0 %v1461
    %2357 = vmatprep.subr.bf16.mxu0 %v1470
    %2358 = vmatpush1.bf16.msra.mxu0 %v1469
    %2359 = vmatprep.subr.bf16.mxu0 %v1478
    %2360 = vmatpush1.bf16.msra.mxu0 %v1477
    %2361 = vmatprep.subr.bf16.mxu0 %v1486
    %2362 = vmatpush1.bf16.msra.mxu0 %v1485
    %2363 = vmatprep.subr.bf16.mxu0 %v1494
    %2364 = vmatpush1.bf16.msra.mxu0 %v1493
    %2365 = vmatprep.subr.bf16.mxu0 %v1502
    %2366 = vmatpush1.bf16.msra.mxu0 %v1501
    %2367 = vmatprep.subr.bf16.mxu0 %v1510
    %2368 = vmatpush1.bf16.msra.mxu0 %v1509
    %2369 = vmatprep.subr.bf16.mxu0 %v1518
    %2370 = vmatpush1.bf16.msra.mxu0 %v1517
    %2371 = vmatprep.subr.bf16.mxu0 %v1526
    %2372 = vmatpush1.bf16.msra.mxu0 %v1525
    %2373 = vmatprep.subr.bf16.mxu0 %v1534
    %2374 = vmatpush1.bf16.msra.mxu0 %v1533
    %2375 = vmatprep.subr.bf16.mxu0 %v1542
    %2376 = vmatpush1.bf16.msra.mxu0 %v1541
    %2377 = vmatprep.subr.bf16.mxu0 %v1550
    %2378 = vmatpush1.bf16.msra.mxu0 %v1549
    %2379 = vmatprep.subr.bf16.mxu0 %v1558
    %2380 = vmatpush1.bf16.msra.mxu0 %v1557
    %2381 = vmatprep.subr.bf16.mxu0 %v1566
    %2382 = vmatpush1.bf16.msra.mxu0 %v1565
    %2383 = vmatprep.subr.bf16.mxu0 %v1574
    %2384 = vmatpush1.bf16.msra.mxu0 %v1573
    %2385 = vmatprep.subr.bf16.mxu0 %v1582
    %2386 = vmatpush1.bf16.msra.mxu0 %v1581
    %2387 = vmatprep.mubr.bf16.mxu0 %v488
    %2388 = vmatmul.mubr.bf16.gmra.mrb[0].mxu0 %v487
    %v2389 = vpop.f32.mrb[0].mxu0
    %v2390 = vadd.f32 %v450, %v2389
    %v2391 = vpop.f32.mrb[0].mxu0
    %v2392 = vadd.f32 %v454, %v2391
    %v2393 = vpop.f32.mrb[0].mxu0
    %v2394 = vadd.f32 %v450, %v2393
    %v2395 = vpop.f32.mrb[0].mxu0
    %v2396 = vadd.f32 %v454, %v2395
    %2397 = vdwg.mxu0
    %2398 = vmatprep.subr.bf16.mxu0 %v1590
    %2399 = vmatpush1.bf16.msra.mxu0 %v1589
    %2400 = vmatprep.subr.bf16.mxu0 %v1598
    %2401 = vmatpush1.bf16.msra.mxu0 %v1597
    %2402 = vmatprep.subr.bf16.mxu0 %v1606
    %2403 = vmatpush1.bf16.msra.mxu0 %v1605
    %2404 = vmatprep.subr.bf16.mxu0 %v1614
    %2405 = vmatpush1.bf16.msra.mxu0 %v1613
    %2406 = vmatprep.subr.bf16.mxu0 %v1622
    %2407 = vmatpush1.bf16.msra.mxu0 %v1621
    %2408 = vmatprep.subr.bf16.mxu0 %v1630
    %2409 = vmatpush1.bf16.msra.mxu0 %v1629
    %2410 = vmatprep.subr.bf16.mxu0 %v1638
    %2411 = vmatpush1.bf16.msra.mxu0 %v1637
    %2412 = vmatprep.subr.bf16.mxu0 %v1646
    %2413 = vmatpush1.bf16.msra.mxu0 %v1645
    %2414 = vmatprep.subr.bf16.mxu0 %v1654
    %2415 = vmatpush1.bf16.msra.mxu0 %v1653
    %2416 = vmatprep.subr.bf16.mxu0 %v1662
    %2417 = vmatpush1.bf16.msra.mxu0 %v1661
    %2418 = vmatprep.subr.bf16.mxu0 %v1670
    %2419 = vmatpush1.bf16.msra.mxu0 %v1669
    %2420 = vmatprep.subr.bf16.mxu0 %v1678
    %2421 = vmatpush1.bf16.msra.mxu0 %v1677
    %2422 = vmatprep.subr.bf16.mxu0 %v1686
    %2423 = vmatpush1.bf16.msra.mxu0 %v1685
    %2424 = vmatprep.subr.bf16.mxu0 %v1694
    %2425 = vmatpush1.bf16.msra.mxu0 %v1693
    %2426 = vmatprep.subr.bf16.mxu0 %v1702
    %2427 = vmatpush1.bf16.msra.mxu0 %v1701
    %2428 = vmatprep.subr.bf16.mxu0 %v1710
    %2429 = vmatpush1.bf16.msra.mxu0 %v1709
    %2430 = vmatprep.mubr.bf16.mxu0 %v490
    %2431 = vmatmul.mubr.bf16.gmra.mrb[0].mxu0 %v489
    %v2432 = vpop.f32.mrb[0].mxu0
    %v2433 = vadd.f32 %v2390, %v2432
    %v2434 = vpop.f32.mrb[0].mxu0
    %v2435 = vadd.f32 %v2392, %v2434
    %v2436 = vpop.f32.mrb[0].mxu0
    %v2437 = vadd.f32 %v2394, %v2436
    %v2438 = vpop.f32.mrb[0].mxu0
    %v2439 = vadd.f32 %v2396, %v2438
    %2440 = vdwg.mxu0
    %2441 = vmatprep.subr.bf16.mxu0 %v1718
    %2442 = vmatpush1.bf16.msra.mxu0 %v1717
    %2443 = vmatprep.subr.bf16.mxu0 %v1726
    %2444 = vmatpush1.bf16.msra.mxu0 %v1725
    %2445 = vmatprep.subr.bf16.mxu0 %v1734
    %2446 = vmatpush1.bf16.msra.mxu0 %v1733
    %2447 = vmatprep.subr.bf16.mxu0 %v1742
    %2448 = vmatpush1.bf16.msra.mxu0 %v1741
    %2449 = vmatprep.subr.bf16.mxu0 %v1750
    %2450 = vmatpush1.bf16.msra.mxu0 %v1749
    %2451 = vmatprep.subr.bf16.mxu0 %v1758
    %2452 = vmatpush1.bf16.msra.mxu0 %v1757
    %2453 = vmatprep.subr.bf16.mxu0 %v1766
    %2454 = vmatpush1.bf16.msra.mxu0 %v1765
    %2455 = vmatprep.subr.bf16.mxu0 %v1774
    %2456 = vmatpush1.bf16.msra.mxu0 %v1773
    %2457 = vmatprep.subr.bf16.mxu0 0
    %2458 = vmatpush1.bf16.msra.mxu0 0
    %2459 = vmatprep.subr.bf16.mxu0 0
    %2460 = vmatpush1.bf16.msra.mxu0 0
    %2461 = vmatprep.subr.bf16.mxu0 0
    %2462 = vmatpush1.bf16.msra.mxu0 0
    %2463 = vmatprep.subr.bf16.mxu0 0
    %2464 = vmatpush1.bf16.msra.mxu0 0
    %2465 = vmatprep.subr.bf16.mxu0 0
    %2466 = vmatpush1.bf16.msra.mxu0 0
    %2467 = vmatprep.subr.bf16.mxu0 0
    %2468 = vmatpush1.bf16.msra.mxu0 0
    %2469 = vmatprep.subr.bf16.mxu0 0
    %2470 = vmatpush1.bf16.msra.mxu0 0
    %2471 = vmatprep.subr.bf16.mxu0 0
    %2472 = vmatpush1.bf16.msra.mxu0 0
    %2473 = vmatprep.mubr.bf16.mxu0 0
    %2474 = vmatmul.mubr.bf16.gmra.mrb[0].mxu0 %v491
    %v2475 = vpop.f32.mrb[0].mxu0
    %v2476 = vadd.f32 %v2433, %v2475
    %v2477 = vpop.f32.mrb[0].mxu0
    %v2478 = vadd.f32 %v2435, %v2477
    %v2479 = vpop.f32.mrb[0].mxu0
    %v2480 = vadd.f32 %v2437, %v2479
    %v2481 = vpop.f32.mrb[0].mxu0
    %v2482 = vadd.f32 %v2439, %v2481
    %2483 = vdwg.mxu0
    %2484 = vmatprep.subr.bf16.mxu0 %v1464
    %2485 = vmatpush1.bf16.msra.mxu0 %v1463
    %2486 = vmatprep.subr.bf16.mxu0 %v1472
    %2487 = vmatpush1.bf16.msra.mxu0 %v1471
    %2488 = vmatprep.subr.bf16.mxu0 %v1480
    %2489 = vmatpush1.bf16.msra.mxu0 %v1479
    %2490 = vmatprep.subr.bf16.mxu0 %v1488
    %2491 = vmatpush1.bf16.msra.mxu0 %v1487
    %2492 = vmatprep.subr.bf16.mxu0 %v1496
    %2493 = vmatpush1.bf16.msra.mxu0 %v1495
    %2494 = vmatprep.subr.bf16.mxu0 %v1504
    %2495 = vmatpush1.bf16.msra.mxu0 %v1503
    %2496 = vmatprep.subr.bf16.mxu0 %v1512
    %2497 = vmatpush1.bf16.msra.mxu0 %v1511
    %2498 = vmatprep.subr.bf16.mxu0 %v1520
    %2499 = vmatpush1.bf16.msra.mxu0 %v1519
    %2500 = vmatprep.subr.bf16.mxu0 %v1528
    %2501 = vmatpush1.bf16.msra.mxu0 %v1527
    %2502 = vmatprep.subr.bf16.mxu0 %v1536
    %2503 = vmatpush1.bf16.msra.mxu0 %v1535
    %2504 = vmatprep.subr.bf16.mxu0 %v1544
    %2505 = vmatpush1.bf16.msra.mxu0 %v1543
    %2506 = vmatprep.subr.bf16.mxu0 %v1552
    %2507 = vmatpush1.bf16.msra.mxu0 %v1551
    %2508 = vmatprep.subr.bf16.mxu0 %v1560
    %2509 = vmatpush1.bf16.msra.mxu0 %v1559
    %2510 = vmatprep.subr.bf16.mxu0 %v1568
    %2511 = vmatpush1.bf16.msra.mxu0 %v1567
    %2512 = vmatprep.subr.bf16.mxu0 %v1576
    %2513 = vmatpush1.bf16.msra.mxu0 %v1575
    %2514 = vmatprep.subr.bf16.mxu0 %v1584
    %2515 = vmatpush1.bf16.msra.mxu0 %v1583
    %2516 = vmatprep.mubr.bf16.mxu0 %v488
    %2517 = vmatmul.mubr.bf16.gmra.mrb[0].mxu0 %v487
    %v2518 = vpop.f32.mrb[0].mxu0
    %v2519 = vadd.f32 %v458, %v2518
    %v2520 = vpop.f32.mrb[0].mxu0
    %v2521 = vadd.f32 %v462, %v2520
    %v2522 = vpop.f32.mrb[0].mxu0
    %v2523 = vadd.f32 %v458, %v2522
    %v2524 = vpop.f32.mrb[0].mxu0
    %v2525 = vadd.f32 %v462, %v2524
    %2526 = vdwg.mxu0
    %2527 = vmatprep.subr.bf16.mxu0 %v1592
    %2528 = vmatpush1.bf16.msra.mxu0 %v1591
    %2529 = vmatprep.subr.bf16.mxu0 %v1600
    %2530 = vmatpush1.bf16.msra.mxu0 %v1599
    %2531 = vmatprep.subr.bf16.mxu0 %v1608
    %2532 = vmatpush1.bf16.msra.mxu0 %v1607
    %2533 = vmatprep.subr.bf16.mxu0 %v1616
    %2534 = vmatpush1.bf16.msra.mxu0 %v1615
    %2535 = vmatprep.subr.bf16.mxu0 %v1624
    %2536 = vmatpush1.bf16.msra.mxu0 %v1623
    %2537 = vmatprep.subr.bf16.mxu0 %v1632
    %2538 = vmatpush1.bf16.msra.mxu0 %v1631
    %2539 = vmatprep.subr.bf16.mxu0 %v1640
    %2540 = vmatpush1.bf16.msra.mxu0 %v1639
    %2541 = vmatprep.subr.bf16.mxu0 %v1648
    %2542 = vmatpush1.bf16.msra.mxu0 %v1647
    %2543 = vmatprep.subr.bf16.mxu0 %v1656
    %2544 = vmatpush1.bf16.msra.mxu0 %v1655
    %2545 = vmatprep.subr.bf16.mxu0 %v1664
    %2546 = vmatpush1.bf16.msra.mxu0 %v1663
    %2547 = vmatprep.subr.bf16.mxu0 %v1672
    %2548 = vmatpush1.bf16.msra.mxu0 %v1671
    %2549 = vmatprep.subr.bf16.mxu0 %v1680
    %2550 = vmatpush1.bf16.msra.mxu0 %v1679
    %2551 = vmatprep.subr.bf16.mxu0 %v1688
    %2552 = vmatpush1.bf16.msra.mxu0 %v1687
    %2553 = vmatprep.subr.bf16.mxu0 %v1696
    %2554 = vmatpush1.bf16.msra.mxu0 %v1695
    %2555 = vmatprep.subr.bf16.mxu0 %v1704
    %2556 = vmatpush1.bf16.msra.mxu0 %v1703
    %2557 = vmatprep.subr.bf16.mxu0 %v1712
    %2558 = vmatpush1.bf16.msra.mxu0 %v1711
    %2559 = vmatprep.mubr.bf16.mxu0 %v490
    %2560 = vmatmul.mubr.bf16.gmra.mrb[0].mxu0 %v489
    %v2561 = vpop.f32.mrb[0].mxu0
    %v2562 = vadd.f32 %v2519, %v2561
    %v2563 = vpop.f32.mrb[0].mxu0
    %v2564 = vadd.f32 %v2521, %v2563
    %v2565 = vpop.f32.mrb[0].mxu0
    %v2566 = vadd.f32 %v2523, %v2565
    %v2567 = vpop.f32.mrb[0].mxu0
    %v2568 = vadd.f32 %v2525, %v2567
    %2569 = vdwg.mxu0
    %2570 = vmatprep.subr.bf16.mxu0 %v1720
    %2571 = vmatpush1.bf16.msra.mxu0 %v1719
    %2572 = vmatprep.subr.bf16.mxu0 %v1728
    %2573 = vmatpush1.bf16.msra.mxu0 %v1727
    %2574 = vmatprep.subr.bf16.mxu0 %v1736
    %2575 = vmatpush1.bf16.msra.mxu0 %v1735
    %2576 = vmatprep.subr.bf16.mxu0 %v1744
    %2577 = vmatpush1.bf16.msra.mxu0 %v1743
    %2578 = vmatprep.subr.bf16.mxu0 %v1752
    %2579 = vmatpush1.bf16.msra.mxu0 %v1751
    %2580 = vmatprep.subr.bf16.mxu0 %v1760
    %2581 = vmatpush1.bf16.msra.mxu0 %v1759
    %2582 = vmatprep.subr.bf16.mxu0 %v1768
    %2583 = vmatpush1.bf16.msra.mxu0 %v1767
    %2584 = vmatprep.subr.bf16.mxu0 %v1776
    %2585 = vmatpush1.bf16.msra.mxu0 %v1775
    %2586 = vmatprep.subr.bf16.mxu0 0
    %2587 = vmatpush1.bf16.msra.mxu0 0
    %2588 = vmatprep.subr.bf16.mxu0 0
    %2589 = vmatpush1.bf16.msra.mxu0 0
    %2590 = vmatprep.subr.bf16.mxu0 0
    %2591 = vmatpush1.bf16.msra.mxu0 0
    %2592 = vmatprep.subr.bf16.mxu0 0
    %2593 = vmatpush1.bf16.msra.mxu0 0
    %2594 = vmatprep.subr.bf16.mxu0 0
    %2595 = vmatpush1.bf16.msra.mxu0 0
    %2596 = vmatprep.subr.bf16.mxu0 0
    %2597 = vmatpush1.bf16.msra.mxu0 0
    %2598 = vmatprep.subr.bf16.mxu0 0
    %2599 = vmatpush1.bf16.msra.mxu0 0
    %2600 = vmatprep.subr.bf16.mxu0 0
    %2601 = vmatpush1.bf16.msra.mxu0 0
    %2602 = vmatprep.mubr.bf16.mxu0 0
    %2603 = vmatmul.mubr.bf16.gmra.mrb[0].mxu0 %v491
    %v2604 = vpop.f32.mrb[0].mxu0
    %v2605 = vadd.f32 %v2562, %v2604
    %v2606 = vpop.f32.mrb[0].mxu0
    %v2607 = vadd.f32 %v2564, %v2606
    %v2608 = vpop.f32.mrb[0].mxu0
    %v2609 = vadd.f32 %v2566, %v2608
    %v2610 = vpop.f32.mrb[0].mxu0
    %v2611 = vadd.f32 %v2568, %v2610
    %2612 = vdwg.mxu0
    %v2613 = vmax.f32 %v2218, 0.0
    %v2614 = vmax.f32 %v2220, 0.0
    %v2615 = vmax.f32 %v2347, 0.0
    %v2616 = vmax.f32 %v2349, 0.0
    %v2617 = vmax.f32 %v2476, 0.0
    %v2618 = vmax.f32 %v2478, 0.0
    %v2619 = vmax.f32 %v2605, 0.0
    %v2620 = vmax.f32 %v2607, 0.0
    %v2621 = vmax.f32 %v2222, 0.0
    %v2622 = vmax.f32 %v2224, 0.0
    %v2623 = vmax.f32 %v2351, 0.0
    %v2624 = vmax.f32 %v2353, 0.0
    %v2625 = vmax.f32 %v2480, 0.0
    %v2626 = vmax.f32 %v2482, 0.0
    %v2627 = vmax.f32 %v2609, 0.0
    %v2628 = vmax.f32 %v2611, 0.0
    %v2629 = vpack.c.bf16 %v2621, %v2613
    %v2630 = vpack.c.bf16 %v2622, %v2614
    %v2631 = vpack.c.bf16 %v2623, %v2615
    %v2632 = vpack.c.bf16 %v2624, %v2616
    %v2633 = vpack.c.bf16 %v2625, %v2617
    %v2634 = vpack.c.bf16 %v2626, %v2618
    %v2635 = vpack.c.bf16 %v2627, %v2619
    %v2636 = vpack.c.bf16 %v2628, %v2620
    %v2637 = vld [vmem:[#allocation6] sm:$0xff]
    %v2638 = vld [vmem:[#allocation6 + $0x8] sm:$0xff]
    %v2639 = vld [vmem:[#allocation6 + $0x10] sm:$0xff]
    %v2640 = vld [vmem:[#allocation6 + $0x18] sm:$0xff]
    %v2641 = vld [vmem:[#allocation6 + $0x20] sm:$0xff]
    %v2642 = vld [vmem:[#allocation6 + $0x28] sm:$0xff]
    %v2643 = vld [vmem:[#allocation6 + $0x30] sm:$0xff]
    %v2644 = vld [vmem:[#allocation6 + $0x38] sm:$0xff]
    %v2645 = vld [vmem:[#allocation6 + $0x40] sm:$0xff]
    %v2646 = vld [vmem:[#allocation6 + $0x48] sm:$0xff]
    %v2647 = vld [vmem:[#allocation6 + $0x50] sm:$0xff]
    %v2648 = vld [vmem:[#allocation6 + $0x58] sm:$0xff]
    %v2649 = vld [vmem:[#allocation6 + $0x60] sm:$0xff]
    %v2650 = vld [vmem:[#allocation6 + $0x68] sm:$0xff]
    %v2651 = vld [vmem:[#allocation6 + $0x70] sm:$0xff]
    %v2652 = vld [vmem:[#allocation6 + $0x78] sm:$0xff]
    %v2653 = vld [vmem:[#allocation6 + $0x80] sm:$0xff]
    %v2654 = vld [vmem:[#allocation6 + $0x88] sm:$0xff]
    %v2655 = vld [vmem:[#allocation6 + $0x90] sm:$0xff]
    %v2656 = vld [vmem:[#allocation6 + $0x98] sm:$0xff]
    %v2657 = vld [vmem:[#allocation6 + $0xa0] sm:$0xff]
    %v2658 = vld [vmem:[#allocation6 + $0xa8] sm:$0xff]
    %v2659 = vld [vmem:[#allocation6 + $0xb0] sm:$0xff]
    %v2660 = vld [vmem:[#allocation6 + $0xb8] sm:$0xff]
    %v2661 = vld [vmem:[#allocation6 + $0xc0] sm:$0xff]
    %v2662 = vld [vmem:[#allocation6 + $0xc8] sm:$0xff]
    %v2663 = vld [vmem:[#allocation6 + $0xd0] sm:$0xff]
    %v2664 = vld [vmem:[#allocation6 + $0xd8] sm:$0xff]
    %v2665 = vld [vmem:[#allocation6 + $0xe0] sm:$0xff]
    %v2666 = vld [vmem:[#allocation6 + $0xe8] sm:$0xff]
    %v2667 = vld [vmem:[#allocation6 + $0xf0] sm:$0xff]
    %v2668 = vld [vmem:[#allocation6 + $0xf8] sm:$0xff]
    %v2669 = vld [vmem:[#allocation6 + $0x100] sm:$0xff]
    %v2670 = vld [vmem:[#allocation6 + $0x108] sm:$0xff]
    %v2671 = vld [vmem:[#allocation6 + $0x110] sm:$0xff]
    %v2672 = vld [vmem:[#allocation6 + $0x118] sm:$0xff]
    %v2673 = vld [vmem:[#allocation6 + $0x120] sm:$0xff]
    %v2674 = vld [vmem:[#allocation6 + $0x128] sm:$0xff]
    %v2675 = vld [vmem:[#allocation6 + $0x130] sm:$0xff]
    %v2676 = vld [vmem:[#allocation6 + $0x138] sm:$0xff]
    %v2677 = vld [vmem:[#allocation6 + $0x140] sm:$0xff]
    %v2678 = vld [vmem:[#allocation6 + $0x148] sm:$0xff]
    %v2679 = vld [vmem:[#allocation6 + $0x150] sm:$0xff]
    %v2680 = vld [vmem:[#allocation6 + $0x158] sm:$0xff]
    %v2681 = vld [vmem:[#allocation6 + $0x160] sm:$0xff]
    %v2682 = vld [vmem:[#allocation6 + $0x168] sm:$0xff]
    %v2683 = vld [vmem:[#allocation6 + $0x170] sm:$0xff]
    %v2684 = vld [vmem:[#allocation6 + $0x178] sm:$0xff]
    %v2685 = vld [vmem:[#allocation6 + $0x180] sm:$0xff]
    %v2686 = vld [vmem:[#allocation6 + $0x188] sm:$0xff]
    %v2687 = vld [vmem:[#allocation6 + $0x190] sm:$0xff]
    %v2688 = vld [vmem:[#allocation6 + $0x198] sm:$0xff]
    %v2689 = vld [vmem:[#allocation6 + $0x1a0] sm:$0xff]
    %v2690 = vld [vmem:[#allocation6 + $0x1a8] sm:$0xff]
    %v2691 = vld [vmem:[#allocation6 + $0x1b0] sm:$0xff]
    %v2692 = vld [vmem:[#allocation6 + $0x1b8] sm:$0xff]
    %v2693 = vld [vmem:[#allocation6 + $0x1c0] sm:$0xff]
    %v2694 = vld [vmem:[#allocation6 + $0x1c8] sm:$0xff]
    %v2695 = vld [vmem:[#allocation6 + $0x1d0] sm:$0xff]
    %v2696 = vld [vmem:[#allocation6 + $0x1d8] sm:$0xff]
    %v2697 = vld [vmem:[#allocation6 + $0x1e0] sm:$0xff]
    %v2698 = vld [vmem:[#allocation6 + $0x1e8] sm:$0xff]
    %v2699 = vld [vmem:[#allocation6 + $0x1f0] sm:$0xff]
    %v2700 = vld [vmem:[#allocation6 + $0x1f8] sm:$0xff]
    %v2701 = vld [vmem:[#allocation6 + $0x200] sm:$0xff]
    %v2702 = vld [vmem:[#allocation6 + $0x208] sm:$0xff]
    %v2703 = vld [vmem:[#allocation6 + $0x210] sm:$0xff]
    %v2704 = vld [vmem:[#allocation6 + $0x218] sm:$0xff]
    %v2705 = vld [vmem:[#allocation6 + $0x220] sm:$0xff]
    %v2706 = vld [vmem:[#allocation6 + $0x228] sm:$0xff]
    %v2707 = vld [vmem:[#allocation6 + $0x230] sm:$0xff]
    %v2708 = vld [vmem:[#allocation6 + $0x238] sm:$0xff]
    %v2709 = vld [vmem:[#allocation6 + $0x240] sm:$0xff]
    %v2710 = vld [vmem:[#allocation6 + $0x248] sm:$0xff]
    %v2711 = vld [vmem:[#allocation6 + $0x250] sm:$0xff]
    %v2712 = vld [vmem:[#allocation6 + $0x258] sm:$0xff]
    %v2713 = vld [vmem:[#allocation6 + $0x260] sm:$0xff]
    %v2714 = vld [vmem:[#allocation6 + $0x268] sm:$0xff]
    %v2715 = vld [vmem:[#allocation6 + $0x270] sm:$0xff]
    %v2716 = vld [vmem:[#allocation6 + $0x278] sm:$0xff]
    %v2717 = vld [vmem:[#allocation6 + $0x280] sm:$0xff]
    %v2718 = vld [vmem:[#allocation6 + $0x288] sm:$0xff]
    %v2719 = vld [vmem:[#allocation6 + $0x290] sm:$0xff]
    %v2720 = vld [vmem:[#allocation6 + $0x298] sm:$0xff]
    %v2721 = vld [vmem:[#allocation6 + $0x2a0] sm:$0xff]
    %v2722 = vld [vmem:[#allocation6 + $0x2a8] sm:$0xff]
    %v2723 = vld [vmem:[#allocation6 + $0x2b0] sm:$0xff]
    %v2724 = vld [vmem:[#allocation6 + $0x2b8] sm:$0xff]
    %v2725 = vld [vmem:[#allocation6 + $0x2c0] sm:$0xff]
    %v2726 = vld [vmem:[#allocation6 + $0x2c8] sm:$0xff]
    %v2727 = vld [vmem:[#allocation6 + $0x2d0] sm:$0xff]
    %v2728 = vld [vmem:[#allocation6 + $0x2d8] sm:$0xff]
    %v2729 = vld [vmem:[#allocation6 + $0x2e0] sm:$0xff]
    %v2730 = vld [vmem:[#allocation6 + $0x2e8] sm:$0xff]
    %v2731 = vld [vmem:[#allocation6 + $0x2f0] sm:$0xff]
    %v2732 = vld [vmem:[#allocation6 + $0x2f8] sm:$0xff]
    %v2733 = vld [vmem:[#allocation6 + $0x300] sm:$0xff]
    %v2734 = vld [vmem:[#allocation6 + $0x308] sm:$0xff]
    %v2735 = vld [vmem:[#allocation6 + $0x310] sm:$0xff]
    %v2736 = vld [vmem:[#allocation6 + $0x318] sm:$0xff]
    %v2737 = vld [vmem:[#allocation6 + $0x320] sm:$0xff]
    %v2738 = vld [vmem:[#allocation6 + $0x328] sm:$0xff]
    %v2739 = vld [vmem:[#allocation6 + $0x330] sm:$0xff]
    %v2740 = vld [vmem:[#allocation6 + $0x338] sm:$0xff]
    %v2741 = vld [vmem:[#allocation6 + $0x340] sm:$0xff]
    %v2742 = vld [vmem:[#allocation6 + $0x348] sm:$0xff]
    %v2743 = vld [vmem:[#allocation6 + $0x350] sm:$0xff]
    %v2744 = vld [vmem:[#allocation6 + $0x358] sm:$0xff]
    %v2745 = vld [vmem:[#allocation6 + $0x360] sm:$0xff]
    %v2746 = vld [vmem:[#allocation6 + $0x368] sm:$0xff]
    %v2747 = vld [vmem:[#allocation6 + $0x370] sm:$0xff]
    %v2748 = vld [vmem:[#allocation6 + $0x378] sm:$0xff]
    %v2749 = vld [vmem:[#allocation6 + $0x380] sm:$0xff]
    %v2750 = vld [vmem:[#allocation6 + $0x388] sm:$0xff]
    %v2751 = vld [vmem:[#allocation6 + $0x390] sm:$0xff]
    %v2752 = vld [vmem:[#allocation6 + $0x398] sm:$0xff]
    %v2753 = vld [vmem:[#allocation6 + $0x3a0] sm:$0xff]
    %v2754 = vld [vmem:[#allocation6 + $0x3a8] sm:$0xff]
    %v2755 = vld [vmem:[#allocation6 + $0x3b0] sm:$0xff]
    %v2756 = vld [vmem:[#allocation6 + $0x3b8] sm:$0xff]
    %v2757 = vld [vmem:[#allocation6 + $0x3c0] sm:$0xff]
    %v2758 = vld [vmem:[#allocation6 + $0x3c8] sm:$0xff]
    %v2759 = vld [vmem:[#allocation6 + $0x3d0] sm:$0xff]
    %v2760 = vld [vmem:[#allocation6 + $0x3d8] sm:$0xff]
    %v2761 = vld [vmem:[#allocation6 + $0x3e0] sm:$0xff]
    %v2762 = vld [vmem:[#allocation6 + $0x3e8] sm:$0xff]
    %v2763 = vld [vmem:[#allocation6 + $0x3f0] sm:$0xff]
    %v2764 = vld [vmem:[#allocation6 + $0x3f8] sm:$0xff]
    %v2765 = vld [vmem:[#allocation7] sm:$0x3]
    %v2767 = vlaneseq
    %v2768 = vshrl.u32 %v2767, 7
    %v2769 = vsub.s32 0, %v2768
    %v2770 = vrot.slane %v2765, %v2769
    %v2771 = vlaneseq
    %v2772 = vshrl.u32 %v2771, 7
    %v2773 = vsub.s32 1, %v2772
    %v2774 = vrot.slane %v2765, %v2773
    %v2905 = vunpack.c.l.b16 %v2637
    %v2906 = vunpack.c.h.b16 %v2637
    %v2907 = vunpack.c.l.b16 %v2638
    %v2908 = vunpack.c.h.b16 %v2638
    %v2909 = vunpack.c.l.b16 %v2639
    %v2910 = vunpack.c.h.b16 %v2639
    %v2911 = vunpack.c.l.b16 %v2640
    %v2912 = vunpack.c.h.b16 %v2640
    %v2913 = vunpack.c.l.b16 %v2641
    %v2914 = vunpack.c.h.b16 %v2641
    %v2915 = vunpack.c.l.b16 %v2642
    %v2916 = vunpack.c.h.b16 %v2642
    %v2917 = vunpack.c.l.b16 %v2643
    %v2918 = vunpack.c.h.b16 %v2643
    %v2919 = vunpack.c.l.b16 %v2644
    %v2920 = vunpack.c.h.b16 %v2644
    %v2921 = vunpack.c.l.b16 %v2645
    %v2922 = vunpack.c.h.b16 %v2645
    %v2923 = vunpack.c.l.b16 %v2646
    %v2924 = vunpack.c.h.b16 %v2646
    %v2925 = vunpack.c.l.b16 %v2647
    %v2926 = vunpack.c.h.b16 %v2647
    %v2927 = vunpack.c.l.b16 %v2648
    %v2928 = vunpack.c.h.b16 %v2648
    %v2929 = vunpack.c.l.b16 %v2649
    %v2930 = vunpack.c.h.b16 %v2649
    %v2931 = vunpack.c.l.b16 %v2650
    %v2932 = vunpack.c.h.b16 %v2650
    %v2933 = vunpack.c.l.b16 %v2651
    %v2934 = vunpack.c.h.b16 %v2651
    %v2935 = vunpack.c.l.b16 %v2652
    %v2936 = vunpack.c.h.b16 %v2652
    %v2937 = vunpack.c.l.b16 %v2653
    %v2938 = vunpack.c.h.b16 %v2653
    %v2939 = vunpack.c.l.b16 %v2654
    %v2940 = vunpack.c.h.b16 %v2654
    %v2941 = vunpack.c.l.b16 %v2655
    %v2942 = vunpack.c.h.b16 %v2655
    %v2943 = vunpack.c.l.b16 %v2656
    %v2944 = vunpack.c.h.b16 %v2656
    %v2945 = vunpack.c.l.b16 %v2657
    %v2946 = vunpack.c.h.b16 %v2657
    %v2947 = vunpack.c.l.b16 %v2658
    %v2948 = vunpack.c.h.b16 %v2658
    %v2949 = vunpack.c.l.b16 %v2659
    %v2950 = vunpack.c.h.b16 %v2659
    %v2951 = vunpack.c.l.b16 %v2660
    %v2952 = vunpack.c.h.b16 %v2660
    %v2953 = vunpack.c.l.b16 %v2661
    %v2954 = vunpack.c.h.b16 %v2661
    %v2955 = vunpack.c.l.b16 %v2662
    %v2956 = vunpack.c.h.b16 %v2662
    %v2957 = vunpack.c.l.b16 %v2663
    %v2958 = vunpack.c.h.b16 %v2663
    %v2959 = vunpack.c.l.b16 %v2664
    %v2960 = vunpack.c.h.b16 %v2664
    %v2961 = vunpack.c.l.b16 %v2665
    %v2962 = vunpack.c.h.b16 %v2665
    %v2963 = vunpack.c.l.b16 %v2666
    %v2964 = vunpack.c.h.b16 %v2666
    %v2965 = vunpack.c.l.b16 %v2667
    %v2966 = vunpack.c.h.b16 %v2667
    %v2967 = vunpack.c.l.b16 %v2668
    %v2968 = vunpack.c.h.b16 %v2668
    %v2969 = vunpack.c.l.b16 %v2669
    %v2970 = vunpack.c.h.b16 %v2669
    %v2971 = vunpack.c.l.b16 %v2670
    %v2972 = vunpack.c.h.b16 %v2670
    %v2973 = vunpack.c.l.b16 %v2671
    %v2974 = vunpack.c.h.b16 %v2671
    %v2975 = vunpack.c.l.b16 %v2672
    %v2976 = vunpack.c.h.b16 %v2672
    %v2977 = vunpack.c.l.b16 %v2673
    %v2978 = vunpack.c.h.b16 %v2673
    %v2979 = vunpack.c.l.b16 %v2674
    %v2980 = vunpack.c.h.b16 %v2674
    %v2981 = vunpack.c.l.b16 %v2675
    %v2982 = vunpack.c.h.b16 %v2675
    %v2983 = vunpack.c.l.b16 %v2676
    %v2984 = vunpack.c.h.b16 %v2676
    %v2985 = vunpack.c.l.b16 %v2677
    %v2986 = vunpack.c.h.b16 %v2677
    %v2987 = vunpack.c.l.b16 %v2678
    %v2988 = vunpack.c.h.b16 %v2678
    %v2989 = vunpack.c.l.b16 %v2679
    %v2990 = vunpack.c.h.b16 %v2679
    %v2991 = vunpack.c.l.b16 %v2680
    %v2992 = vunpack.c.h.b16 %v2680
    %v2993 = vunpack.c.l.b16 %v2681
    %v2994 = vunpack.c.h.b16 %v2681
    %v2995 = vunpack.c.l.b16 %v2682
    %v2996 = vunpack.c.h.b16 %v2682
    %v2997 = vunpack.c.l.b16 %v2683
    %v2998 = vunpack.c.h.b16 %v2683
    %v2999 = vunpack.c.l.b16 %v2684
    %v3000 = vunpack.c.h.b16 %v2684
    %v3001 = vunpack.c.l.b16 %v2685
    %v3002 = vunpack.c.h.b16 %v2685
    %v3003 = vunpack.c.l.b16 %v2686
    %v3004 = vunpack.c.h.b16 %v2686
    %v3005 = vunpack.c.l.b16 %v2687
    %v3006 = vunpack.c.h.b16 %v2687
    %v3007 = vunpack.c.l.b16 %v2688
    %v3008 = vunpack.c.h.b16 %v2688
    %v3009 = vunpack.c.l.b16 %v2689
    %v3010 = vunpack.c.h.b16 %v2689
    %v3011 = vunpack.c.l.b16 %v2690
    %v3012 = vunpack.c.h.b16 %v2690
    %v3013 = vunpack.c.l.b16 %v2691
    %v3014 = vunpack.c.h.b16 %v2691
    %v3015 = vunpack.c.l.b16 %v2692
    %v3016 = vunpack.c.h.b16 %v2692
    %v3017 = vunpack.c.l.b16 %v2693
    %v3018 = vunpack.c.h.b16 %v2693
    %v3019 = vunpack.c.l.b16 %v2694
    %v3020 = vunpack.c.h.b16 %v2694
    %v3021 = vunpack.c.l.b16 %v2695
    %v3022 = vunpack.c.h.b16 %v2695
    %v3023 = vunpack.c.l.b16 %v2696
    %v3024 = vunpack.c.h.b16 %v2696
    %v3025 = vunpack.c.l.b16 %v2697
    %v3026 = vunpack.c.h.b16 %v2697
    %v3027 = vunpack.c.l.b16 %v2698
    %v3028 = vunpack.c.h.b16 %v2698
    %v3029 = vunpack.c.l.b16 %v2699
    %v3030 = vunpack.c.h.b16 %v2699
    %v3031 = vunpack.c.l.b16 %v2700
    %v3032 = vunpack.c.h.b16 %v2700
    %v3033 = vunpack.c.l.b16 %v2701
    %v3034 = vunpack.c.h.b16 %v2701
    %v3035 = vunpack.c.l.b16 %v2702
    %v3036 = vunpack.c.h.b16 %v2702
    %v3037 = vunpack.c.l.b16 %v2703
    %v3038 = vunpack.c.h.b16 %v2703
    %v3039 = vunpack.c.l.b16 %v2704
    %v3040 = vunpack.c.h.b16 %v2704
    %v3041 = vunpack.c.l.b16 %v2705
    %v3042 = vunpack.c.h.b16 %v2705
    %v3043 = vunpack.c.l.b16 %v2706
    %v3044 = vunpack.c.h.b16 %v2706
    %v3045 = vunpack.c.l.b16 %v2707
    %v3046 = vunpack.c.h.b16 %v2707
    %v3047 = vunpack.c.l.b16 %v2708
    %v3048 = vunpack.c.h.b16 %v2708
    %v3049 = vunpack.c.l.b16 %v2709
    %v3050 = vunpack.c.h.b16 %v2709
    %v3051 = vunpack.c.l.b16 %v2710
    %v3052 = vunpack.c.h.b16 %v2710
    %v3053 = vunpack.c.l.b16 %v2711
    %v3054 = vunpack.c.h.b16 %v2711
    %v3055 = vunpack.c.l.b16 %v2712
    %v3056 = vunpack.c.h.b16 %v2712
    %v3057 = vunpack.c.l.b16 %v2713
    %v3058 = vunpack.c.h.b16 %v2713
    %v3059 = vunpack.c.l.b16 %v2714
    %v3060 = vunpack.c.h.b16 %v2714
    %v3061 = vunpack.c.l.b16 %v2715
    %v3062 = vunpack.c.h.b16 %v2715
    %v3063 = vunpack.c.l.b16 %v2716
    %v3064 = vunpack.c.h.b16 %v2716
    %v3065 = vunpack.c.l.b16 %v2717
    %v3066 = vunpack.c.h.b16 %v2717
    %v3067 = vunpack.c.l.b16 %v2718
    %v3068 = vunpack.c.h.b16 %v2718
    %v3069 = vunpack.c.l.b16 %v2719
    %v3070 = vunpack.c.h.b16 %v2719
    %v3071 = vunpack.c.l.b16 %v2720
    %v3072 = vunpack.c.h.b16 %v2720
    %v3073 = vunpack.c.l.b16 %v2721
    %v3074 = vunpack.c.h.b16 %v2721
    %v3075 = vunpack.c.l.b16 %v2722
    %v3076 = vunpack.c.h.b16 %v2722
    %v3077 = vunpack.c.l.b16 %v2723
    %v3078 = vunpack.c.h.b16 %v2723
    %v3079 = vunpack.c.l.b16 %v2724
    %v3080 = vunpack.c.h.b16 %v2724
    %v3081 = vunpack.c.l.b16 %v2725
    %v3082 = vunpack.c.h.b16 %v2725
    %v3083 = vunpack.c.l.b16 %v2726
    %v3084 = vunpack.c.h.b16 %v2726
    %v3085 = vunpack.c.l.b16 %v2727
    %v3086 = vunpack.c.h.b16 %v2727
    %v3087 = vunpack.c.l.b16 %v2728
    %v3088 = vunpack.c.h.b16 %v2728
    %v3089 = vunpack.c.l.b16 %v2729
    %v3090 = vunpack.c.h.b16 %v2729
    %v3091 = vunpack.c.l.b16 %v2730
    %v3092 = vunpack.c.h.b16 %v2730
    %v3093 = vunpack.c.l.b16 %v2731
    %v3094 = vunpack.c.h.b16 %v2731
    %v3095 = vunpack.c.l.b16 %v2732
    %v3096 = vunpack.c.h.b16 %v2732
    %v3097 = vunpack.c.l.b16 %v2733
    %v3098 = vunpack.c.h.b16 %v2733
    %v3099 = vunpack.c.l.b16 %v2734
    %v3100 = vunpack.c.h.b16 %v2734
    %v3101 = vunpack.c.l.b16 %v2735
    %v3102 = vunpack.c.h.b16 %v2735
    %v3103 = vunpack.c.l.b16 %v2736
    %v3104 = vunpack.c.h.b16 %v2736
    %v3105 = vunpack.c.l.b16 %v2737
    %v3106 = vunpack.c.h.b16 %v2737
    %v3107 = vunpack.c.l.b16 %v2738
    %v3108 = vunpack.c.h.b16 %v2738
    %v3109 = vunpack.c.l.b16 %v2739
    %v3110 = vunpack.c.h.b16 %v2739
    %v3111 = vunpack.c.l.b16 %v2740
    %v3112 = vunpack.c.h.b16 %v2740
    %v3113 = vunpack.c.l.b16 %v2741
    %v3114 = vunpack.c.h.b16 %v2741
    %v3115 = vunpack.c.l.b16 %v2742
    %v3116 = vunpack.c.h.b16 %v2742
    %v3117 = vunpack.c.l.b16 %v2743
    %v3118 = vunpack.c.h.b16 %v2743
    %v3119 = vunpack.c.l.b16 %v2744
    %v3120 = vunpack.c.h.b16 %v2744
    %v3121 = vunpack.c.l.b16 %v2745
    %v3122 = vunpack.c.h.b16 %v2745
    %v3123 = vunpack.c.l.b16 %v2746
    %v3124 = vunpack.c.h.b16 %v2746
    %v3125 = vunpack.c.l.b16 %v2747
    %v3126 = vunpack.c.h.b16 %v2747
    %v3127 = vunpack.c.l.b16 %v2748
    %v3128 = vunpack.c.h.b16 %v2748
    %v3129 = vunpack.c.l.b16 %v2749
    %v3130 = vunpack.c.h.b16 %v2749
    %v3131 = vunpack.c.l.b16 %v2750
    %v3132 = vunpack.c.h.b16 %v2750
    %v3133 = vunpack.c.l.b16 %v2751
    %v3134 = vunpack.c.h.b16 %v2751
    %v3135 = vunpack.c.l.b16 %v2752
    %v3136 = vunpack.c.h.b16 %v2752
    %v3137 = vunpack.c.l.b16 %v2753
    %v3138 = vunpack.c.h.b16 %v2753
    %v3139 = vunpack.c.l.b16 %v2754
    %v3140 = vunpack.c.h.b16 %v2754
    %v3141 = vunpack.c.l.b16 %v2755
    %v3142 = vunpack.c.h.b16 %v2755
    %v3143 = vunpack.c.l.b16 %v2756
    %v3144 = vunpack.c.h.b16 %v2756
    %v3145 = vunpack.c.l.b16 %v2757
    %v3146 = vunpack.c.h.b16 %v2757
    %v3147 = vunpack.c.l.b16 %v2758
    %v3148 = vunpack.c.h.b16 %v2758
    %v3149 = vunpack.c.l.b16 %v2759
    %v3150 = vunpack.c.h.b16 %v2759
    %v3151 = vunpack.c.l.b16 %v2760
    %v3152 = vunpack.c.h.b16 %v2760
    %v3153 = vunpack.c.l.b16 %v2761
    %v3154 = vunpack.c.h.b16 %v2761
    %v3155 = vunpack.c.l.b16 %v2762
    %v3156 = vunpack.c.h.b16 %v2762
    %v3157 = vunpack.c.l.b16 %v2763
    %v3158 = vunpack.c.h.b16 %v2763
    %v3159 = vunpack.c.l.b16 %v2764
    %v3160 = vunpack.c.h.b16 %v2764
    %v3161 = vpack.c.b16 %v2907, %v2905
    %v3162 = vpack.c.b16 %v2908, %v2906
    %v3163 = vpack.c.b16 %v2911, %v2909
    %v3164 = vpack.c.b16 %v2912, %v2910
    %v3165 = vpack.c.b16 %v2915, %v2913
    %v3166 = vpack.c.b16 %v2916, %v2914
    %v3167 = vpack.c.b16 %v2919, %v2917
    %v3168 = vpack.c.b16 %v2920, %v2918
    %v3169 = vpack.c.b16 %v2923, %v2921
    %v3170 = vpack.c.b16 %v2924, %v2922
    %v3171 = vpack.c.b16 %v2927, %v2925
    %v3172 = vpack.c.b16 %v2928, %v2926
    %v3173 = vpack.c.b16 %v2931, %v2929
    %v3174 = vpack.c.b16 %v2932, %v2930
    %v3175 = vpack.c.b16 %v2935, %v2933
    %v3176 = vpack.c.b16 %v2936, %v2934
    %v3177 = vpack.c.b16 %v2939, %v2937
    %v3178 = vpack.c.b16 %v2940, %v2938
    %v3179 = vpack.c.b16 %v2943, %v2941
    %v3180 = vpack.c.b16 %v2944, %v2942
    %v3181 = vpack.c.b16 %v2947, %v2945
    %v3182 = vpack.c.b16 %v2948, %v2946
    %v3183 = vpack.c.b16 %v2951, %v2949
    %v3184 = vpack.c.b16 %v2952, %v2950
    %v3185 = vpack.c.b16 %v2955, %v2953
    %v3186 = vpack.c.b16 %v2956, %v2954
    %v3187 = vpack.c.b16 %v2959, %v2957
    %v3188 = vpack.c.b16 %v2960, %v2958
    %v3189 = vpack.c.b16 %v2963, %v2961
    %v3190 = vpack.c.b16 %v2964, %v2962
    %v3191 = vpack.c.b16 %v2967, %v2965
    %v3192 = vpack.c.b16 %v2968, %v2966
    %v3193 = vpack.c.b16 %v2971, %v2969
    %v3194 = vpack.c.b16 %v2972, %v2970
    %v3195 = vpack.c.b16 %v2975, %v2973
    %v3196 = vpack.c.b16 %v2976, %v2974
    %v3197 = vpack.c.b16 %v2979, %v2977
    %v3198 = vpack.c.b16 %v2980, %v2978
    %v3199 = vpack.c.b16 %v2983, %v2981
    %v3200 = vpack.c.b16 %v2984, %v2982
    %v3201 = vpack.c.b16 %v2987, %v2985
    %v3202 = vpack.c.b16 %v2988, %v2986
    %v3203 = vpack.c.b16 %v2991, %v2989
    %v3204 = vpack.c.b16 %v2992, %v2990
    %v3205 = vpack.c.b16 %v2995, %v2993
    %v3206 = vpack.c.b16 %v2996, %v2994
    %v3207 = vpack.c.b16 %v2999, %v2997
    %v3208 = vpack.c.b16 %v3000, %v2998
    %v3209 = vpack.c.b16 %v3003, %v3001
    %v3210 = vpack.c.b16 %v3004, %v3002
    %v3211 = vpack.c.b16 %v3007, %v3005
    %v3212 = vpack.c.b16 %v3008, %v3006
    %v3213 = vpack.c.b16 %v3011, %v3009
    %v3214 = vpack.c.b16 %v3012, %v3010
    %v3215 = vpack.c.b16 %v3015, %v3013
    %v3216 = vpack.c.b16 %v3016, %v3014
    %v3217 = vpack.c.b16 %v3019, %v3017
    %v3218 = vpack.c.b16 %v3020, %v3018
    %v3219 = vpack.c.b16 %v3023, %v3021
    %v3220 = vpack.c.b16 %v3024, %v3022
    %v3221 = vpack.c.b16 %v3027, %v3025
    %v3222 = vpack.c.b16 %v3028, %v3026
    %v3223 = vpack.c.b16 %v3031, %v3029
    %v3224 = vpack.c.b16 %v3032, %v3030
    %v3225 = vpack.c.b16 %v3035, %v3033
    %v3226 = vpack.c.b16 %v3036, %v3034
    %v3227 = vpack.c.b16 %v3039, %v3037
    %v3228 = vpack.c.b16 %v3040, %v3038
    %v3229 = vpack.c.b16 %v3043, %v3041
    %v3230 = vpack.c.b16 %v3044, %v3042
    %v3231 = vpack.c.b16 %v3047, %v3045
    %v3232 = vpack.c.b16 %v3048, %v3046
    %v3233 = vpack.c.b16 %v3051, %v3049
    %v3234 = vpack.c.b16 %v3052, %v3050
    %v3235 = vpack.c.b16 %v3055, %v3053
    %v3236 = vpack.c.b16 %v3056, %v3054
    %v3237 = vpack.c.b16 %v3059, %v3057
    %v3238 = vpack.c.b16 %v3060, %v3058
    %v3239 = vpack.c.b16 %v3063, %v3061
    %v3240 = vpack.c.b16 %v3064, %v3062
    %v3241 = vpack.c.b16 %v3067, %v3065
    %v3242 = vpack.c.b16 %v3068, %v3066
    %v3243 = vpack.c.b16 %v3071, %v3069
    %v3244 = vpack.c.b16 %v3072, %v3070
    %v3245 = vpack.c.b16 %v3075, %v3073
    %v3246 = vpack.c.b16 %v3076, %v3074
    %v3247 = vpack.c.b16 %v3079, %v3077
    %v3248 = vpack.c.b16 %v3080, %v3078
    %v3249 = vpack.c.b16 %v3083, %v3081
    %v3250 = vpack.c.b16 %v3084, %v3082
    %v3251 = vpack.c.b16 %v3087, %v3085
    %v3252 = vpack.c.b16 %v3088, %v3086
    %v3253 = vpack.c.b16 %v3091, %v3089
    %v3254 = vpack.c.b16 %v3092, %v3090
    %v3255 = vpack.c.b16 %v3095, %v3093
    %v3256 = vpack.c.b16 %v3096, %v3094
    %v3257 = vpack.c.b16 %v3099, %v3097
    %v3258 = vpack.c.b16 %v3100, %v3098
    %v3259 = vpack.c.b16 %v3103, %v3101
    %v3260 = vpack.c.b16 %v3104, %v3102
    %v3261 = vpack.c.b16 %v3107, %v3105
    %v3262 = vpack.c.b16 %v3108, %v3106
    %v3263 = vpack.c.b16 %v3111, %v3109
    %v3264 = vpack.c.b16 %v3112, %v3110
    %v3265 = vpack.c.b16 %v3115, %v3113
    %v3266 = vpack.c.b16 %v3116, %v3114
    %v3267 = vpack.c.b16 %v3119, %v3117
    %v3268 = vpack.c.b16 %v3120, %v3118
    %v3269 = vpack.c.b16 %v3123, %v3121
    %v3270 = vpack.c.b16 %v3124, %v3122
    %v3271 = vpack.c.b16 %v3127, %v3125
    %v3272 = vpack.c.b16 %v3128, %v3126
    %v3273 = vpack.c.b16 %v3131, %v3129
    %v3274 = vpack.c.b16 %v3132, %v3130
    %v3275 = vpack.c.b16 %v3135, %v3133
    %v3276 = vpack.c.b16 %v3136, %v3134
    %v3277 = vpack.c.b16 %v3139, %v3137
    %v3278 = vpack.c.b16 %v3140, %v3138
    %v3279 = vpack.c.b16 %v3143, %v3141
    %v3280 = vpack.c.b16 %v3144, %v3142
    %v3281 = vpack.c.b16 %v3147, %v3145
    %v3282 = vpack.c.b16 %v3148, %v3146
    %v3283 = vpack.c.b16 %v3151, %v3149
    %v3284 = vpack.c.b16 %v3152, %v3150
    %v3285 = vpack.c.b16 %v3155, %v3153
    %v3286 = vpack.c.b16 %v3156, %v3154
    %v3287 = vpack.c.b16 %v3159, %v3157
    %v3288 = vpack.c.b16 %v3160, %v3158
    %3417 = vmatprep.subr.bf16.mxu0 %v3162
    %3418 = vmatpush1.bf16.msra.mxu0 %v3161
    %3419 = vmatprep.subr.bf16.mxu0 %v3164
    %3420 = vmatpush1.bf16.msra.mxu0 %v3163
    %3421 = vmatprep.subr.bf16.mxu0 %v3166
    %3422 = vmatpush1.bf16.msra.mxu0 %v3165
    %3423 = vmatprep.subr.bf16.mxu0 %v3168
    %3424 = vmatpush1.bf16.msra.mxu0 %v3167
    %3425 = vmatprep.subr.bf16.mxu0 %v3170
    %3426 = vmatpush1.bf16.msra.mxu0 %v3169
    %3427 = vmatprep.subr.bf16.mxu0 %v3172
    %3428 = vmatpush1.bf16.msra.mxu0 %v3171
    %3429 = vmatprep.subr.bf16.mxu0 %v3174
    %3430 = vmatpush1.bf16.msra.mxu0 %v3173
    %3431 = vmatprep.subr.bf16.mxu0 %v3176
    %3432 = vmatpush1.bf16.msra.mxu0 %v3175
    %3433 = vmatprep.subr.bf16.mxu0 %v3178
    %3434 = vmatpush1.bf16.msra.mxu0 %v3177
    %3435 = vmatprep.subr.bf16.mxu0 %v3180
    %3436 = vmatpush1.bf16.msra.mxu0 %v3179
    %3437 = vmatprep.subr.bf16.mxu0 %v3182
    %3438 = vmatpush1.bf16.msra.mxu0 %v3181
    %3439 = vmatprep.subr.bf16.mxu0 %v3184
    %3440 = vmatpush1.bf16.msra.mxu0 %v3183
    %3441 = vmatprep.subr.bf16.mxu0 %v3186
    %3442 = vmatpush1.bf16.msra.mxu0 %v3185
    %3443 = vmatprep.subr.bf16.mxu0 %v3188
    %3444 = vmatpush1.bf16.msra.mxu0 %v3187
    %3445 = vmatprep.subr.bf16.mxu0 %v3190
    %3446 = vmatpush1.bf16.msra.mxu0 %v3189
    %3447 = vmatprep.subr.bf16.mxu0 %v3192
    %3448 = vmatpush1.bf16.msra.mxu0 %v3191
    %3449 = vmatprep.mubr.bf16.mxu0 %v2630
    %3450 = vmatmul.mubr.bf16.gmra.mrb[0].mxu0 %v2629
    %v3451 = vpop.f32.mrb[0].mxu0
    %v3452 = vadd.f32 %v2770, %v3451
    %v3453 = vpop.f32.mrb[0].mxu0
    %v3454 = vadd.f32 %v2774, %v3453
    %v3455 = vpop.f32.mrb[0].mxu0
    %v3456 = vadd.f32 %v2770, %v3455
    %v3457 = vpop.f32.mrb[0].mxu0
    %v3458 = vadd.f32 %v2774, %v3457
    %3459 = vdwg.mxu0
    %3460 = vmatprep.subr.bf16.mxu0 %v3194
    %3461 = vmatpush1.bf16.msra.mxu0 %v3193
    %3462 = vmatprep.subr.bf16.mxu0 %v3196
    %3463 = vmatpush1.bf16.msra.mxu0 %v3195
    %3464 = vmatprep.subr.bf16.mxu0 %v3198
    %3465 = vmatpush1.bf16.msra.mxu0 %v3197
    %3466 = vmatprep.subr.bf16.mxu0 %v3200
    %3467 = vmatpush1.bf16.msra.mxu0 %v3199
    %3468 = vmatprep.subr.bf16.mxu0 %v3202
    %3469 = vmatpush1.bf16.msra.mxu0 %v3201
    %3470 = vmatprep.subr.bf16.mxu0 %v3204
    %3471 = vmatpush1.bf16.msra.mxu0 %v3203
    %3472 = vmatprep.subr.bf16.mxu0 %v3206
    %3473 = vmatpush1.bf16.msra.mxu0 %v3205
    %3474 = vmatprep.subr.bf16.mxu0 %v3208
    %3475 = vmatpush1.bf16.msra.mxu0 %v3207
    %3476 = vmatprep.subr.bf16.mxu0 %v3210
    %3477 = vmatpush1.bf16.msra.mxu0 %v3209
    %3478 = vmatprep.subr.bf16.mxu0 %v3212
    %3479 = vmatpush1.bf16.msra.mxu0 %v3211
    %3480 = vmatprep.subr.bf16.mxu0 %v3214
    %3481 = vmatpush1.bf16.msra.mxu0 %v3213
    %3482 = vmatprep.subr.bf16.mxu0 %v3216
    %3483 = vmatpush1.bf16.msra.mxu0 %v3215
    %3484 = vmatprep.subr.bf16.mxu0 %v3218
    %3485 = vmatpush1.bf16.msra.mxu0 %v3217
    %3486 = vmatprep.subr.bf16.mxu0 %v3220
    %3487 = vmatpush1.bf16.msra.mxu0 %v3219
    %3488 = vmatprep.subr.bf16.mxu0 %v3222
    %3489 = vmatpush1.bf16.msra.mxu0 %v3221
    %3490 = vmatprep.subr.bf16.mxu0 %v3224
    %3491 = vmatpush1.bf16.msra.mxu0 %v3223
    %3492 = vmatprep.mubr.bf16.mxu0 %v2632
    %3493 = vmatmul.mubr.bf16.gmra.mrb[0].mxu0 %v2631
    %v3494 = vpop.f32.mrb[0].mxu0
    %v3495 = vadd.f32 %v3452, %v3494
    %v3496 = vpop.f32.mrb[0].mxu0
    %v3497 = vadd.f32 %v3454, %v3496
    %v3498 = vpop.f32.mrb[0].mxu0
    %v3499 = vadd.f32 %v3456, %v3498
    %v3500 = vpop.f32.mrb[0].mxu0
    %v3501 = vadd.f32 %v3458, %v3500
    %3502 = vdwg.mxu0
    %3503 = vmatprep.subr.bf16.mxu0 %v3226
    %3504 = vmatpush1.bf16.msra.mxu0 %v3225
    %3505 = vmatprep.subr.bf16.mxu0 %v3228
    %3506 = vmatpush1.bf16.msra.mxu0 %v3227
    %3507 = vmatprep.subr.bf16.mxu0 %v3230
    %3508 = vmatpush1.bf16.msra.mxu0 %v3229
    %3509 = vmatprep.subr.bf16.mxu0 %v3232
    %3510 = vmatpush1.bf16.msra.mxu0 %v3231
    %3511 = vmatprep.subr.bf16.mxu0 %v3234
    %3512 = vmatpush1.bf16.msra.mxu0 %v3233
    %3513 = vmatprep.subr.bf16.mxu0 %v3236
    %3514 = vmatpush1.bf16.msra.mxu0 %v3235
    %3515 = vmatprep.subr.bf16.mxu0 %v3238
    %3516 = vmatpush1.bf16.msra.mxu0 %v3237
    %3517 = vmatprep.subr.bf16.mxu0 %v3240
    %3518 = vmatpush1.bf16.msra.mxu0 %v3239
    %3519 = vmatprep.subr.bf16.mxu0 %v3242
    %3520 = vmatpush1.bf16.msra.mxu0 %v3241
    %3521 = vmatprep.subr.bf16.mxu0 %v3244
    %3522 = vmatpush1.bf16.msra.mxu0 %v3243
    %3523 = vmatprep.subr.bf16.mxu0 %v3246
    %3524 = vmatpush1.bf16.msra.mxu0 %v3245
    %3525 = vmatprep.subr.bf16.mxu0 %v3248
    %3526 = vmatpush1.bf16.msra.mxu0 %v3247
    %3527 = vmatprep.subr.bf16.mxu0 %v3250
    %3528 = vmatpush1.bf16.msra.mxu0 %v3249
    %3529 = vmatprep.subr.bf16.mxu0 %v3252
    %3530 = vmatpush1.bf16.msra.mxu0 %v3251
    %3531 = vmatprep.subr.bf16.mxu0 %v3254
    %3532 = vmatpush1.bf16.msra.mxu0 %v3253
    %3533 = vmatprep.subr.bf16.mxu0 %v3256
    %3534 = vmatpush1.bf16.msra.mxu0 %v3255
    %3535 = vmatprep.mubr.bf16.mxu0 %v2634
    %3536 = vmatmul.mubr.bf16.gmra.mrb[0].mxu0 %v2633
    %v3537 = vpop.f32.mrb[0].mxu0
    %v3538 = vadd.f32 %v3495, %v3537
    %v3539 = vpop.f32.mrb[0].mxu0
    %v3540 = vadd.f32 %v3497, %v3539
    %v3541 = vpop.f32.mrb[0].mxu0
    %v3542 = vadd.f32 %v3499, %v3541
    %v3543 = vpop.f32.mrb[0].mxu0
    %v3544 = vadd.f32 %v3501, %v3543
    %3545 = vdwg.mxu0
    %3546 = vmatprep.subr.bf16.mxu0 %v3258
    %3547 = vmatpush1.bf16.msra.mxu0 %v3257
    %3548 = vmatprep.subr.bf16.mxu0 %v3260
    %3549 = vmatpush1.bf16.msra.mxu0 %v3259
    %3550 = vmatprep.subr.bf16.mxu0 %v3262
    %3551 = vmatpush1.bf16.msra.mxu0 %v3261
    %3552 = vmatprep.subr.bf16.mxu0 %v3264
    %3553 = vmatpush1.bf16.msra.mxu0 %v3263
    %3554 = vmatprep.subr.bf16.mxu0 %v3266
    %3555 = vmatpush1.bf16.msra.mxu0 %v3265
    %3556 = vmatprep.subr.bf16.mxu0 %v3268
    %3557 = vmatpush1.bf16.msra.mxu0 %v3267
    %3558 = vmatprep.subr.bf16.mxu0 %v3270
    %3559 = vmatpush1.bf16.msra.mxu0 %v3269
    %3560 = vmatprep.subr.bf16.mxu0 %v3272
    %3561 = vmatpush1.bf16.msra.mxu0 %v3271
    %3562 = vmatprep.subr.bf16.mxu0 %v3274
    %3563 = vmatpush1.bf16.msra.mxu0 %v3273
    %3564 = vmatprep.subr.bf16.mxu0 %v3276
    %3565 = vmatpush1.bf16.msra.mxu0 %v3275
    %3566 = vmatprep.subr.bf16.mxu0 %v3278
    %3567 = vmatpush1.bf16.msra.mxu0 %v3277
    %3568 = vmatprep.subr.bf16.mxu0 %v3280
    %3569 = vmatpush1.bf16.msra.mxu0 %v3279
    %3570 = vmatprep.subr.bf16.mxu0 %v3282
    %3571 = vmatpush1.bf16.msra.mxu0 %v3281
    %3572 = vmatprep.subr.bf16.mxu0 %v3284
    %3573 = vmatpush1.bf16.msra.mxu0 %v3283
    %3574 = vmatprep.subr.bf16.mxu0 %v3286
    %3575 = vmatpush1.bf16.msra.mxu0 %v3285
    %3576 = vmatprep.subr.bf16.mxu0 %v3288
    %3577 = vmatpush1.bf16.msra.mxu0 %v3287
    %3578 = vmatprep.mubr.bf16.mxu0 %v2636
    %3579 = vmatmul.mubr.bf16.gmra.mrb[0].mxu0 %v2635
    %v3580 = vpop.f32.mrb[0].mxu0
    %v3581 = vadd.f32 %v3538, %v3580
    %v3582 = vpop.f32.mrb[0].mxu0
    %v3583 = vadd.f32 %v3540, %v3582
    %v3584 = vpop.f32.mrb[0].mxu0
    %v3585 = vadd.f32 %v3542, %v3584
    %v3586 = vpop.f32.mrb[0].mxu0
    %v3587 = vadd.f32 %v3544, %v3586
    %3588 = vdwg.mxu0
    %v3589 = vmax.f32 %v3581, 0.0
    %v3590 = vmax.f32 %v3583, 0.0
    %v3591 = vmax.f32 %v3585, 0.0
    %v3592 = vmax.f32 %v3587, 0.0
    %v3593 = vpack.c.bf16 %v3591, %v3589
    %v3594 = vpack.c.bf16 %v3592, %v3590
    %v3595 = vld [vmem:[#allocation9] sm:$0xf]
    %v3596 = vld [vmem:[#allocation9 + $0x4] sm:$0xf]
    %v3597 = vld [vmem:[#allocation9 + $0x8] sm:$0xf]
    %v3598 = vld [vmem:[#allocation9 + $0xc] sm:$0xf]
    %v3599 = vld [vmem:[#allocation9 + $0x10] sm:$0xf]
    %v3600 = vld [vmem:[#allocation9 + $0x14] sm:$0xf]
    %v3601 = vld [vmem:[#allocation9 + $0x18] sm:$0xf]
    %v3602 = vld [vmem:[#allocation9 + $0x1c] sm:$0xf]
    %v3603 = vld [vmem:[#allocation9 + $0x20] sm:$0xf]
    %v3604 = vld [vmem:[#allocation9 + $0x24] sm:$0xf]
    %v3605 = vld [vmem:[#allocation9 + $0x28] sm:$0xf]
    %v3606 = vld [vmem:[#allocation9 + $0x2c] sm:$0xf]
    %v3607 = vld [vmem:[#allocation9 + $0x30] sm:$0xf]
    %v3608 = vld [vmem:[#allocation9 + $0x34] sm:$0xf]
    %v3609 = vld [vmem:[#allocation9 + $0x38] sm:$0xf]
    %v3610 = vld [vmem:[#allocation9 + $0x3c] sm:$0xf]
    %v3611 = vld [vmem:[#allocation9 + $0x40] sm:$0xf]
    %v3612 = vld [vmem:[#allocation9 + $0x44] sm:$0xf]
    %v3613 = vld [vmem:[#allocation9 + $0x48] sm:$0xf]
    %v3614 = vld [vmem:[#allocation9 + $0x4c] sm:$0xf]
    %v3615 = vld [vmem:[#allocation9 + $0x50] sm:$0xf]
    %v3616 = vld [vmem:[#allocation9 + $0x54] sm:$0xf]
    %v3617 = vld [vmem:[#allocation9 + $0x58] sm:$0xf]
    %v3618 = vld [vmem:[#allocation9 + $0x5c] sm:$0xf]
    %v3619 = vld [vmem:[#allocation9 + $0x60] sm:$0xf]
    %v3620 = vld [vmem:[#allocation9 + $0x64] sm:$0xf]
    %v3621 = vld [vmem:[#allocation9 + $0x68] sm:$0xf]
    %v3622 = vld [vmem:[#allocation9 + $0x6c] sm:$0xf]
    %v3623 = vld [vmem:[#allocation9 + $0x70] sm:$0xf]
    %v3624 = vld [vmem:[#allocation9 + $0x74] sm:$0xf]
    %v3625 = vld [vmem:[#allocation9 + $0x78] sm:$0xf]
    %v3626 = vld [vmem:[#allocation9 + $0x7c] sm:$0xf]
    %v3627 = vld [vmem:[#allocation10] sm:$0x1]
    %v3629 = vlaneseq
    %v3630 = vshrl.u32 %v3629, 7
    %v3631 = vsub.s32 0, %v3630
    %v3632 = vrot.slane %v3627, %v3631
    %v3666 = vunpack.c.l.b16 %v3595
    %v3667 = vunpack.c.l.b16 %v3596
    %v3668 = vunpack.c.l.b16 %v3597
    %v3669 = vunpack.c.l.b16 %v3598
    %v3670 = vunpack.c.l.b16 %v3599
    %v3671 = vunpack.c.l.b16 %v3600
    %v3672 = vunpack.c.l.b16 %v3601
    %v3673 = vunpack.c.l.b16 %v3602
    %v3674 = vunpack.c.l.b16 %v3603
    %v3675 = vunpack.c.l.b16 %v3604
    %v3676 = vunpack.c.l.b16 %v3605
    %v3677 = vunpack.c.l.b16 %v3606
    %v3678 = vunpack.c.l.b16 %v3607
    %v3679 = vunpack.c.l.b16 %v3608
    %v3680 = vunpack.c.l.b16 %v3609
    %v3681 = vunpack.c.l.b16 %v3610
    %v3682 = vunpack.c.l.b16 %v3611
    %v3683 = vunpack.c.l.b16 %v3612
    %v3684 = vunpack.c.l.b16 %v3613
    %v3685 = vunpack.c.l.b16 %v3614
    %v3686 = vunpack.c.l.b16 %v3615
    %v3687 = vunpack.c.l.b16 %v3616
    %v3688 = vunpack.c.l.b16 %v3617
    %v3689 = vunpack.c.l.b16 %v3618
    %v3690 = vunpack.c.l.b16 %v3619
    %v3691 = vunpack.c.l.b16 %v3620
    %v3692 = vunpack.c.l.b16 %v3621
    %v3693 = vunpack.c.l.b16 %v3622
    %v3694 = vunpack.c.l.b16 %v3623
    %v3695 = vunpack.c.l.b16 %v3624
    %v3696 = vunpack.c.l.b16 %v3625
    %v3697 = vunpack.c.l.b16 %v3626
    %v3698 = vpack.c.b16 %v3667, %v3666
    %v3699 = vpack.c.b16 %v3669, %v3668
    %v3700 = vpack.c.b16 %v3671, %v3670
    %v3701 = vpack.c.b16 %v3673, %v3672
    %v3702 = vpack.c.b16 %v3675, %v3674
    %v3703 = vpack.c.b16 %v3677, %v3676
    %v3704 = vpack.c.b16 %v3679, %v3678
    %v3705 = vpack.c.b16 %v3681, %v3680
    %v3706 = vpack.c.b16 %v3683, %v3682
    %v3707 = vpack.c.b16 %v3685, %v3684
    %v3708 = vpack.c.b16 %v3687, %v3686
    %v3709 = vpack.c.b16 %v3689, %v3688
    %v3710 = vpack.c.b16 %v3691, %v3690
    %v3711 = vpack.c.b16 %v3693, %v3692
    %v3712 = vpack.c.b16 %v3695, %v3694
    %v3713 = vpack.c.b16 %v3697, %v3696
    %3730 = vmatprep.subr.bf16.mxu0 0
    %3731 = vmatpush1.bf16.msra.mxu0 %v3698
    %3732 = vmatprep.subr.bf16.mxu0 0
    %3733 = vmatpush1.bf16.msra.mxu0 %v3699
    %3734 = vmatprep.subr.bf16.mxu0 0
    %3735 = vmatpush1.bf16.msra.mxu0 %v3700
    %3736 = vmatprep.subr.bf16.mxu0 0
    %3737 = vmatpush1.bf16.msra.mxu0 %v3701
    %3738 = vmatprep.subr.bf16.mxu0 0
    %3739 = vmatpush1.bf16.msra.mxu0 %v3702
    %3740 = vmatprep.subr.bf16.mxu0 0
    %3741 = vmatpush1.bf16.msra.mxu0 %v3703
    %3742 = vmatprep.subr.bf16.mxu0 0
    %3743 = vmatpush1.bf16.msra.mxu0 %v3704
    %3744 = vmatprep.subr.bf16.mxu0 0
    %3745 = vmatpush1.bf16.msra.mxu0 %v3705
    %3746 = vmatprep.subr.bf16.mxu0 0
    %3747 = vmatpush1.bf16.msra.mxu0 %v3706
    %3748 = vmatprep.subr.bf16.mxu0 0
    %3749 = vmatpush1.bf16.msra.mxu0 %v3707
    %3750 = vmatprep.subr.bf16.mxu0 0
    %3751 = vmatpush1.bf16.msra.mxu0 %v3708
    %3752 = vmatprep.subr.bf16.mxu0 0
    %3753 = vmatpush1.bf16.msra.mxu0 %v3709
    %3754 = vmatprep.subr.bf16.mxu0 0
    %3755 = vmatpush1.bf16.msra.mxu0 %v3710
    %3756 = vmatprep.subr.bf16.mxu0 0
    %3757 = vmatpush1.bf16.msra.mxu0 %v3711
    %3758 = vmatprep.subr.bf16.mxu0 0
    %3759 = vmatpush1.bf16.msra.mxu0 %v3712
    %3760 = vmatprep.subr.bf16.mxu0 0
    %3761 = vmatpush1.bf16.msra.mxu0 %v3713
    %3762 = vmatprep.mubr.bf16.mxu0 %v3594
    %3763 = vmatmul.mubr.bf16.gmra.mrb[0].mxu0 %v3593
    %v3764 = vpop.f32.mrb[0].mxu0
    %v3765 = vadd.f32 %v3632, %v3764
    %v3766 = vpop.f32.mrb[0].mxu0
    %v3767 = vpop.f32.mrb[0].mxu0
    %v3768 = vadd.f32 %v3632, %v3767
    %v3769 = vpop.f32.mrb[0].mxu0
    %3770 = vdwg.mxu0
    %3771 = vst [vmem:[%s7] sm:$0xff] %v3765
    %3772 = vst [vmem:[%s7 + $0x8] sm:$0xff] %v3768
    // Predicated region
    $region54: #{net_forward.1} parent=1 // pred_check
      _
    $region55: #{net_forward.1} parent=1 // pred_check_branch
      %3774 = sbr.rel (0) target = $region57
    $region56: #{net_forward.1} parent=1 // pred_region
      _
    $region57: #{net_forward.1} parent=1 // pred_fallthru
      _
    // Predicated region
    $region58: #{net_forward.1} parent=1 // pred_check
      _
    $region59: #{net_forward.1} parent=1 // pred_check_branch
      %3776 = sbr.rel (0) target = $region61
    $region60: #{net_forward.1} parent=1 // pred_region
      _
    $region61: #{net_forward.1} parent=1 // pred_fallthru
      _
    %3777 = vsyncpa [#allocation3], 1
    %3778 = vsyncpa [#allocation5], 1
    %3779 = vsyncpa [#allocation8], 1
    %3780 = vsyncpa [#allocation11], 1

</llo_original>
